<compile_context>
chip_gen: v5e
topology: v5e:2x2
jax: 0.10.0
libtpu: 0.0.40
codegen_flags: <defaults>
</compile_context>

<pallas_src>
import functools

import jax
import jax.numpy as jnp
from jax.experimental import pallas as pl
from jax.experimental.pallas import tpu as pltpu

BN_EPS = 1e-5
LANE = 128


def _round_up(x, m):
    return (x + m - 1) // m * m


# ----------------------------- Pallas kernels ------------------------------

def _mm_bn_kernel(x_ref, w_ref, b_ref, o_ref, acc_ref, *, relu):
    """bf16 matmul tile accumulated in f32; fused BN bias (+ReLU) on finalize."""
    k = pl.program_id(2)

    @pl.when(k == 0)
    def _():
        acc_ref[...] = jnp.zeros_like(acc_ref)

    acc_ref[...] += jnp.dot(x_ref[...], w_ref[...],
                            preferred_element_type=jnp.float32)

    @pl.when(k == pl.num_programs(2) - 1)
    def _():
        y = acc_ref[...] + b_ref[...]
        if relu:
            y = jnp.maximum(y, 0.0)
        o_ref[...] = y


def _mm_bn_res_kernel(x_ref, w_ref, b_ref, r_ref, o_ref, acc_ref, *, relu):
    """Same as above plus residual add before the activation."""
    k = pl.program_id(2)

    @pl.when(k == 0)
    def _():
        acc_ref[...] = jnp.zeros_like(acc_ref)

    acc_ref[...] += jnp.dot(x_ref[...], w_ref[...],
                            preferred_element_type=jnp.float32)

    @pl.when(k == pl.num_programs(2) - 1)
    def _():
        y = acc_ref[...] + b_ref[...] + r_ref[...]
        if relu:
            y = jnp.maximum(y, 0.0)
        o_ref[...] = y


def _maxpool_kernel(even_ref, odd_ref, o_ref):
    # even_ref: (1, Lout+1, C) -> rows xp[2l]; odd_ref: (1, Lout, C) -> xp[2l+1]
    lout = o_ref.shape[1]
    e = even_ref[0]                 # (Lout+1, C)
    b = odd_ref[0]                  # (Lout,   C)
    a = e[0:lout, :]                # xp[2l]
    c = e[1:lout + 1, :]            # xp[2l+2]
    o_ref[0] = jnp.maximum(jnp.maximum(a, b), c)


# ------------------------------ op wrappers --------------------------------

def conv1d_bn(x_nlc, w_oik, scale, bias, *, stride, padding, relu,
              residual=None):
    """Conv1d(bias=False) + BatchNorm1d(eval) [+ residual] [+ ReLU].

    x_nlc:    (N, L, Cp_in) f32 activations; channels may be lane-padded.
    w_oik:    PyTorch weight layout (Cout, Cin, K) with Cin <= Cp_in.
    residual: optional (N, Lout, Cp_out) f32.
    Returns (N, Lout, Cp_out) f32 with Cp_out = round_up(Cout, 128); real
    channels live in the first Cout lanes, pad lanes are zero.
    """
    N, L, Cp_in = x_nlc.shape
    Cout, Cin, K = w_oik.shape
    Lout = (L + 2 * padding - K) // stride + 1
    Cp_out = _round_up(Cout, LANE)

    # Weights: fold BN scale, pad channels, order rows (k, cin), cast to bf16.
    w_kic = jnp.transpose(w_oik, (2, 1, 0)).astype(jnp.float32)
    w_kic = w_kic * scale.astype(jnp.float32)[None, None, :]
    w_kic = jnp.pad(w_kic, ((0, 0), (0, Cp_in - Cin), (0, Cp_out - Cout)))
    Kc = K * Cp_in
    wmat = w_kic.reshape(Kc, Cp_out).astype(jnp.bfloat16)
    b2 = jnp.pad(bias.astype(jnp.float32), (0, Cp_out - Cout)).reshape(1, Cp_out)

    # im2col (XLA glue, bf16 to halve bytes).  TODO(synk): move into kernel.
    xb = x_nlc.astype(jnp.bfloat16)
    xp = jnp.pad(xb, ((0, 0), (padding, padding), (0, 0)))
    idx = (jnp.arange(Lout) * stride)[:, None] + jnp.arange(K)[None, :]
    cols = xp[:, idx, :].reshape(N * Lout, Kc)

    # Tiling: M rows x Cout lanes, reduction (Kc) last.
    M = N * Lout
    tm = min(256, _round_up(M, 16))
    Mp = _round_up(M, tm)
    tco = 256 if (Cp_out % 256 == 0) else 128
    if Kc <= 512:
        tk = Kc
    elif Kc % 512 == 0:
        tk = 512
    elif Kc % 256 == 0:
        tk = 256
    else:
        tk = 128
    nk = Kc // tk

    if Mp != M:
        cols = jnp.pad(cols, ((0, Mp - M), (0, 0)))

    grid = (Mp // tm, Cp_out // tco, nk)
    x_spec = pl.BlockSpec((tm, tk), lambda i, j, k: (i, k))
    w_spec = pl.BlockSpec((tk, tco), lambda i, j, k: (k, j))
    b_spec = pl.BlockSpec((1, tco), lambda i, j, k: (0, j))
    o_spec = pl.BlockSpec((tm, tco), lambda i, j, k: (i, j))
    out_shape = jax.ShapeDtypeStruct((Mp, Cp_out), jnp.float32)
    scratch = [pltpu.VMEM((tm, tco), jnp.float32)]
    cparams = pltpu.CompilerParams(
        dimension_semantics=("parallel", "parallel", "arbitrary"),
        vmem_limit_bytes=32 * 1024 * 1024)

    if residual is None:
        out = pl.pallas_call(
            functools.partial(_mm_bn_kernel, relu=relu),
            out_shape=out_shape,
            grid=grid,
            in_specs=[x_spec, w_spec, b_spec],
            out_specs=o_spec,
            scratch_shapes=scratch,
            compiler_params=cparams,
        )(cols, wmat, b2)
    else:
        r2 = residual.astype(jnp.float32).reshape(M, Cp_out)
        if Mp != M:
            r2 = jnp.pad(r2, ((0, Mp - M), (0, 0)))
        r_spec = pl.BlockSpec((tm, tco), lambda i, j, k: (i, j))
        out = pl.pallas_call(
            functools.partial(_mm_bn_res_kernel, relu=relu),
            out_shape=out_shape,
            grid=grid,
            in_specs=[x_spec, w_spec, b_spec, r_spec],
            out_specs=o_spec,
            scratch_shapes=scratch,
            compiler_params=cparams,
        )(cols, wmat, b2, r2)

    return out[:M].reshape(N, Lout, Cp_out)


def maxpool1d_k3s2p1(x_nlc):
    """MaxPool1d(kernel_size=3, stride=2, padding=1) on (N, L, C)."""
    N, L, C = x_nlc.shape
    Lout = (L + 2 - 3) // 2 + 1
    neg = jnp.finfo(jnp.float32).min
    xp = jnp.pad(x_nlc, ((0, 0), (1, 1), (0, 0)), constant_values=neg)
    # Phase split (reads input once): window l = {xp[2l], xp[2l+1], xp[2l+2]}.
    even = xp[:, 0:2 * Lout + 1:2, :]   # (N, Lout+1, C)
    odd = xp[:, 1:2 * Lout:2, :]        # (N, Lout,   C)
    out = pl.pallas_call(
        _maxpool_kernel,
        out_shape=jax.ShapeDtypeStruct((N, Lout, C), jnp.float32),
        grid=(N,),
        in_specs=[pl.BlockSpec((1, Lout + 1, C), lambda n: (n, 0, 0)),
                  pl.BlockSpec((1, Lout, C), lambda n: (n, 0, 0))],
        out_specs=pl.BlockSpec((1, Lout, C), lambda n: (n, 0, 0)),
        compiler_params=pltpu.CompilerParams(
            dimension_semantics=("parallel",)),
    )(even, odd)
    return out


# --------------------------- parameter building ----------------------------

def _bn_fold(gamma, beta, mean, var):
    scale = gamma / jnp.sqrt(var + BN_EPS)
    bias = beta - mean * scale
    return scale, bias


def _init_conv(key, cout, cin, k):
    fan_in = cin * k
    std = (2.0 / fan_in) ** 0.5
    return jax.random.normal(key, (cout, cin, k), jnp.float32) * std


def _init_bn(c):
    # PyTorch BatchNorm1d defaults: gamma=1, beta=0, running_mean=0, var=1.
    return (jnp.ones((c,), jnp.float32), jnp.zeros((c,), jnp.float32),
            jnp.zeros((c,), jnp.float32), jnp.ones((c,), jnp.float32))


def build_resnet_params(key, model_width, layer_dims):
    keys = iter(jax.random.split(key, 1024))
    params = {
        "stem_w": _init_conv(next(keys), model_width, 1, 7),
        "stem_bn": _bn_fold(*_init_bn(model_width)),
        "layers": [],
    }
    in_ch = model_width
    for mult, nblocks, stride0 in zip([1, 2, 4, 8], layer_dims, [1, 2, 2, 2]):
        out_ch = model_width * mult
        strides = [stride0] + [1] * (nblocks - 1)
        blocks = []
        for s in strides:
            blk = {
                "stride": s,
                "conv1_w": _init_conv(next(keys), out_ch, in_ch, 3),
                "bn1": _bn_fold(*_init_bn(out_ch)),
                "conv2_w": _init_conv(next(keys), out_ch, out_ch, 3),
                "bn2": _bn_fold(*_init_bn(out_ch)),
            }
            if s != 1 or in_ch != out_ch:
                blk["down_w"] = _init_conv(next(keys), out_ch, in_ch, 1)
                blk["down_bn"] = _bn_fold(*_init_bn(out_ch))
            blocks.append(blk)
            in_ch = out_ch
        params["layers"].append(blocks)
    return params


# ------------------------------ forward pass -------------------------------

def basic_block_forward(x, blk):
    s = blk["stride"]
    if "down_w" in blk:
        identity = conv1d_bn(x, blk["down_w"], *blk["down_bn"],
                             stride=s, padding=0, relu=False)
    else:
        identity = x
    h = conv1d_bn(x, blk["conv1_w"], *blk["bn1"],
                  stride=s, padding=1, relu=True)
    # conv2 + BN + residual + ReLU fused in one kernel call.
    return conv1d_bn(h, blk["conv2_w"], *blk["bn2"],
                     stride=1, padding=1, relu=True, residual=identity)


def resnet_forward(params, x_ncl):
    x = jnp.transpose(x_ncl, (0, 2, 1))          # (N, C=1, L) -> (N, L, C)
    x = conv1d_bn(x, params["stem_w"], *params["stem_bn"],
                  stride=2, padding=3, relu=True)
    x = maxpool1d_k3s2p1(x)
    for blocks in params["layers"]:
        for blk in blocks:
            x = basic_block_forward(x, blk)
    c_final = params["layers"][-1][-1]["conv2_w"].shape[0]
    x = x[:, :, :c_final]                        # drop lane padding
    return jnp.transpose(x, (0, 2, 1))           # back to PyTorch (N, C, L)


# ---------------------------------- main ------------------------------------

if __name__ == "__main__":
    key = jax.random.PRNGKey(0)
    kx, kp = jax.random.split(key)

    N, L = 2, 64
    model_width, layer_dims = 8, [1, 1, 1, 1]

    x = jax.random.normal(kx, (N, 1, L), jnp.float32)   # PyTorch NCL input
    params = build_resnet_params(kp, model_width, layer_dims)

    fwd = jax.jit(lambda inp: resnet_forward(params, inp))
    out = fwd(x)
    jax.block_until_ready(out)

    # 64 -> stem/2 -> 32 -> pool/2 -> 16 -> /1 -> 16 -> /2 -> 8 -> /2 -> 4 -> /2 -> 2
    assert out.shape == (N, model_width * 8, 2), out.shape
    assert out.dtype == jnp.float32
    assert bool(jnp.all(jnp.isfinite(out)))
    print("KERNEL_OK")
</pallas_src>

<mosaic_0001>
module attributes {stable_mosaic.version = 11 : i64} {
  func.func @_mm_bn_kernel(%arg0: i32, %arg1: i32, %arg2: i32, %arg3: memref<64x7xbf16, #tpu.memory_space<vmem>>, %arg4: memref<7x128xbf16, #tpu.memory_space<vmem>>, %arg5: memref<1x128xf32, #tpu.memory_space<vmem>>, %arg6: memref<64x128xf32, #tpu.memory_space<vmem>>, %arg7: memref<64x128xf32, #tpu.memory_space<vmem>>) attributes {dimension_semantics = [#tpu.dimension_semantics<parallel>, #tpu.dimension_semantics<parallel>, #tpu.dimension_semantics<arbitrary>], iteration_bounds = array<i64: 1, 1, 1>, scalar_prefetch = 0 : i64, scratch_operands = 1 : i64, tpu.core_type = #tpu.core_type<tc>, window_params = [{transform_indices = @transform_0, window_bounds = array<i64: 64, 7>}, {transform_indices = @transform_1, window_bounds = array<i64: 7, 128>}, {transform_indices = @transform_2, window_bounds = array<i64: 1, 128>}, {transform_indices = @transform_3, window_bounds = array<i64: 64, 128>}]} {
    %c0_i32 = arith.constant 0 : i32
    %0 = arith.cmpi eq, %arg2, %c0_i32 : i32
    %1 = arith.extui %0 : i1 to i32
    %c0_i32_0 = arith.constant 0 : i32
    %2 = arith.cmpi ne, %1, %c0_i32_0 : i32
    scf.if %2 {
      %cst_10 = arith.constant 0.000000e+00 : f32
      %12 = vector.broadcast %cst_10 : f32 to vector<64x128xf32>
      %c0_11 = arith.constant 0 : index
      %c0_12 = arith.constant 0 : index
      %13 = vector.load %arg7[%c0_11, %c0_12] : memref<64x128xf32, #tpu.memory_space<vmem>>, vector<64x128xf32>
      tpu.vector_store %arg7[%c0_11, %c0_12], %12 {strides = array<i32>} : memref<64x128xf32, #tpu.memory_space<vmem>>, vector<64x128xf32>,
    } else {
    }
    %c0 = arith.constant 0 : index
    %c0_1 = arith.constant 0 : index
    %3 = vector.load %arg7[%c0, %c0_1] : memref<64x128xf32, #tpu.memory_space<vmem>>, vector<64x128xf32>
    %c0_2 = arith.constant 0 : index
    %c0_3 = arith.constant 0 : index
    %4 = vector.load %arg3[%c0_2, %c0_3] : memref<64x7xbf16, #tpu.memory_space<vmem>>, vector<64x7xbf16>
    %c0_4 = arith.constant 0 : index
    %c0_5 = arith.constant 0 : index
    %5 = vector.load %arg4[%c0_4, %c0_5] : memref<7x128xbf16, #tpu.memory_space<vmem>>, vector<7x128xbf16>
    %cst = arith.constant dense<0.000000e+00> : vector<64x128xf32>
    %6 = tpu.matmul %4, %5, %cst {dimension_numbers = #tpu.dot_dimension_numbers<[1], [0], [0], [1], [0, 0, 1, 1], [], []>} : vector<64x7xbf16>, vector<7x128xbf16>, vector<64x128xf32> -> vector<64x128xf32>
    %7 = arith.addf %3, %6 : vector<64x128xf32>
    %c0_6 = arith.constant 0 : index
    %c0_7 = arith.constant 0 : index
    %8 = vector.load %arg7[%c0_6, %c0_7] : memref<64x128xf32, #tpu.memory_space<vmem>>, vector<64x128xf32>
    tpu.vector_store %arg7[%c0_6, %c0_7], %7 {strides = array<i32>} : memref<64x128xf32, #tpu.memory_space<vmem>>, vector<64x128xf32>,
    %c0_i32_8 = arith.constant 0 : i32
    %9 = arith.cmpi eq, %arg2, %c0_i32_8 : i32
    %10 = arith.extui %9 : i1 to i32
    %c0_i32_9 = arith.constant 0 : i32
    %11 = arith.cmpi ne, %10, %c0_i32_9 : i32
    scf.if %11 {
      %c0_10 = arith.constant 0 : index
      %c0_11 = arith.constant 0 : index
      %12 = vector.load %arg7[%c0_10, %c0_11] : memref<64x128xf32, #tpu.memory_space<vmem>>, vector<64x128xf32>
      %c0_12 = arith.constant 0 : index
      %c0_13 = arith.constant 0 : index
      %13 = vector.load %arg5[%c0_12, %c0_13] : memref<1x128xf32, #tpu.memory_space<vmem>>, vector<1x128xf32>
      %14 = vector.broadcast %13 : vector<1x128xf32> to vector<64x128xf32>
      %15 = arith.addf %12, %14 : vector<64x128xf32>
      %cst_14 = arith.constant 0.000000e+00 : f32
      %16 = vector.broadcast %cst_14 : f32 to vector<64x128xf32>
      %17 = arith.maximumf %15, %16 : vector<64x128xf32>
      %c0_15 = arith.constant 0 : index
      %c0_16 = arith.constant 0 : index
      %18 = vector.load %arg6[%c0_15, %c0_16] : memref<64x128xf32, #tpu.memory_space<vmem>>, vector<64x128xf32>
      tpu.vector_store %arg6[%c0_15, %c0_16], %17 {strides = array<i32>} : memref<64x128xf32, #tpu.memory_space<vmem>>, vector<64x128xf32>,
    } else {
    }
    return
  }
  func.func @transform_0(%arg0: i32, %arg1: i32, %arg2: i32) -> (i32, i32) {
    %c0_i32 = arith.constant 0 : i32
    return %arg0, %arg2 : i32, i32
  }
  func.func @transform_1(%arg0: i32, %arg1: i32, %arg2: i32) -> (i32, i32) {
    %c0_i32 = arith.constant 0 : i32
    return %arg2, %arg1 : i32, i32
  }
  func.func @transform_2(%arg0: i32, %arg1: i32, %arg2: i32) -> (i32, i32) {
    %c0_i32 = arith.constant 0 : i32
    %c0_i32_0 = arith.constant 0 : i32
    return %c0_i32, %arg1 : i32, i32
  }
  func.func @transform_3(%arg0: i32, %arg1: i32, %arg2: i32) -> (i32, i32) {
    %c0_i32 = arith.constant 0 : i32
    return %arg0, %arg1 : i32, i32
  }
}

module attributes {stable_mosaic.version = 11 : i64} {
  func.func @_maxpool_kernel(%arg0: i32, %arg1: memref<1x17x128xf32, #tpu.memory_space<vmem>>, %arg2: memref<1x16x128xf32, #tpu.memory_space<vmem>>, %arg3: memref<1x16x128xf32, #tpu.memory_space<vmem>>) attributes {dimension_semantics = [#tpu.dimension_semantics<parallel>], iteration_bounds = array<i64: 2>, scalar_prefetch = 0 : i64, scratch_operands = 0 : i64, tpu.core_type = #tpu.core_type<tc>, window_params = [{transform_indices = @transform_0, window_bounds = array<i64: 1, 17, 128>}, {transform_indices = @transform_1, window_bounds = array<i64: 1, 16, 128>}, {transform_indices = @transform_2, window_bounds = array<i64: 1, 16, 128>}]} {
    %c0 = arith.constant 0 : index
    %c0_0 = arith.constant 0 : index
    %c0_1 = arith.constant 0 : index
    %0 = vector.load %arg1[%c0, %c0_0, %c0_1] : memref<1x17x128xf32, #tpu.memory_space<vmem>>, vector<1x17x128xf32>
    %1 = vector.shape_cast %0 : vector<1x17x128xf32> to vector<17x128xf32>
    %c0_2 = arith.constant 0 : index
    %c0_3 = arith.constant 0 : index
    %c0_4 = arith.constant 0 : index
    %2 = vector.load %arg2[%c0_2, %c0_3, %c0_4] : memref<1x16x128xf32, #tpu.memory_space<vmem>>, vector<1x16x128xf32>
    %3 = vector.shape_cast %2 : vector<1x16x128xf32> to vector<16x128xf32>
    %4 = vector.extract_strided_slice %1 {offsets = [0, 0], sizes = [16, 128], strides = [1, 1]} : vector<17x128xf32> to vector<16x128xf32>
    %5 = vector.extract_strided_slice %1 {offsets = [1, 0], sizes = [16, 128], strides = [1, 1]} : vector<17x128xf32> to vector<16x128xf32>
    %6 = arith.maximumf %4, %3 : vector<16x128xf32>
    %7 = arith.maximumf %6, %5 : vector<16x128xf32>
    %c0_5 = arith.constant 0 : index
    %c0_6 = arith.constant 0 : index
    %c0_7 = arith.constant 0 : index
    %8 = vector.load %arg3[%c0_5, %c0_6, %c0_7] : memref<1x16x128xf32, #tpu.memory_space<vmem>>, vector<1x16x128xf32>
    %9 = vector.shape_cast %8 : vector<1x16x128xf32> to vector<16x128xf32>
    %10 = vector.shape_cast %7 : vector<16x128xf32> to vector<1x16x128xf32>
    tpu.vector_store %arg3[%c0_5, %c0_6, %c0_7], %10 {strides = array<i32>} : memref<1x16x128xf32, #tpu.memory_space<vmem>>, vector<1x16x128xf32>,
    return
  }
  func.func @transform_0(%arg0: i32) -> (i32, i32, i32) {
    %c0_i32 = arith.constant 0 : i32
    %c0_i32_0 = arith.constant 0 : i32
    %c0_i32_1 = arith.constant 0 : i32
    return %arg0, %c0_i32, %c0_i32_0 : i32, i32, i32
  }
  func.func @transform_1(%arg0: i32) -> (i32, i32, i32) {
    %c0_i32 = arith.constant 0 : i32
    %c0_i32_0 = arith.constant 0 : i32
    %c0_i32_1 = arith.constant 0 : i32
    return %arg0, %c0_i32, %c0_i32_0 : i32, i32, i32
  }
  func.func @transform_2(%arg0: i32) -> (i32, i32, i32) {
    %c0_i32 = arith.constant 0 : i32
    %c0_i32_0 = arith.constant 0 : i32
    %c0_i32_1 = arith.constant 0 : i32
    return %arg0, %c0_i32, %c0_i32_0 : i32, i32, i32
  }
}

module attributes {stable_mosaic.version = 11 : i64} {
  func.func @_mm_bn_kernel(%arg0: i32, %arg1: i32, %arg2: i32, %arg3: memref<32x384xbf16, #tpu.memory_space<vmem>>, %arg4: memref<384x128xbf16, #tpu.memory_space<vmem>>, %arg5: memref<1x128xf32, #tpu.memory_space<vmem>>, %arg6: memref<32x128xf32, #tpu.memory_space<vmem>>, %arg7: memref<32x128xf32, #tpu.memory_space<vmem>>) attributes {dimension_semantics = [#tpu.dimension_semantics<parallel>, #tpu.dimension_semantics<parallel>, #tpu.dimension_semantics<arbitrary>], iteration_bounds = array<i64: 1, 1, 1>, scalar_prefetch = 0 : i64, scratch_operands = 1 : i64, tpu.core_type = #tpu.core_type<tc>, window_params = [{transform_indices = @transform_0, window_bounds = array<i64: 32, 384>}, {transform_indices = @transform_1, window_bounds = array<i64: 384, 128>}, {transform_indices = @transform_2, window_bounds = array<i64: 1, 128>}, {transform_indices = @transform_3, window_bounds = array<i64: 32, 128>}]} {
    %c0_i32 = arith.constant 0 : i32
    %0 = arith.cmpi eq, %arg2, %c0_i32 : i32
    %1 = arith.extui %0 : i1 to i32
    %c0_i32_0 = arith.constant 0 : i32
    %2 = arith.cmpi ne, %1, %c0_i32_0 : i32
    scf.if %2 {
      %cst_10 = arith.constant 0.000000e+00 : f32
      %12 = vector.broadcast %cst_10 : f32 to vector<32x128xf32>
      %c0_11 = arith.constant 0 : index
      %c0_12 = arith.constant 0 : index
      %13 = vector.load %arg7[%c0_11, %c0_12] : memref<32x128xf32, #tpu.memory_space<vmem>>, vector<32x128xf32>
      tpu.vector_store %arg7[%c0_11, %c0_12], %12 {strides = array<i32>} : memref<32x128xf32, #tpu.memory_space<vmem>>, vector<32x128xf32>,
    } else {
    }
    %c0 = arith.constant 0 : index
    %c0_1 = arith.constant 0 : index
    %3 = vector.load %arg7[%c0, %c0_1] : memref<32x128xf32, #tpu.memory_space<vmem>>, vector<32x128xf32>
    %c0_2 = arith.constant 0 : index
    %c0_3 = arith.constant 0 : index
    %4 = vector.load %arg3[%c0_2, %c0_3] : memref<32x384xbf16, #tpu.memory_space<vmem>>, vector<32x384xbf16>
    %c0_4 = arith.constant 0 : index
    %c0_5 = arith.constant 0 : index
    %5 = vector.load %arg4[%c0_4, %c0_5] : memref<384x128xbf16, #tpu.memory_space<vmem>>, vector<384x128xbf16>
    %cst = arith.constant dense<0.000000e+00> : vector<32x128xf32>
    %6 = tpu.matmul %4, %5, %cst {dimension_numbers = #tpu.dot_dimension_numbers<[1], [0], [0], [1], [0, 0, 1, 1], [], []>} : vector<32x384xbf16>, vector<384x128xbf16>, vector<32x128xf32> -> vector<32x128xf32>
    %7 = arith.addf %3, %6 : vector<32x128xf32>
    %c0_6 = arith.constant 0 : index
    %c0_7 = arith.constant 0 : index
    %8 = vector.load %arg7[%c0_6, %c0_7] : memref<32x128xf32, #tpu.memory_space<vmem>>, vector<32x128xf32>
    tpu.vector_store %arg7[%c0_6, %c0_7], %7 {strides = array<i32>} : memref<32x128xf32, #tpu.memory_space<vmem>>, vector<32x128xf32>,
    %c0_i32_8 = arith.constant 0 : i32
    %9 = arith.cmpi eq, %arg2, %c0_i32_8 : i32
    %10 = arith.extui %9 : i1 to i32
    %c0_i32_9 = arith.constant 0 : i32
    %11 = arith.cmpi ne, %10, %c0_i32_9 : i32
    scf.if %11 {
      %c0_10 = arith.constant 0 : index
      %c0_11 = arith.constant 0 : index
      %12 = vector.load %arg7[%c0_10, %c0_11] : memref<32x128xf32, #tpu.memory_space<vmem>>, vector<32x128xf32>
      %c0_12 = arith.constant 0 : index
      %c0_13 = arith.constant 0 : index
      %13 = vector.load %arg5[%c0_12, %c0_13] : memref<1x128xf32, #tpu.memory_space<vmem>>, vector<1x128xf32>
      %14 = vector.broadcast %13 : vector<1x128xf32> to vector<32x128xf32>
      %15 = arith.addf %12, %14 : vector<32x128xf32>
      %cst_14 = arith.constant 0.000000e+00 : f32
      %16 = vector.broadcast %cst_14 : f32 to vector<32x128xf32>
      %17 = arith.maximumf %15, %16 : vector<32x128xf32>
      %c0_15 = arith.constant 0 : index
      %c0_16 = arith.constant 0 : index
      %18 = vector.load %arg6[%c0_15, %c0_16] : memref<32x128xf32, #tpu.memory_space<vmem>>, vector<32x128xf32>
      tpu.vector_store %arg6[%c0_15, %c0_16], %17 {strides = array<i32>} : memref<32x128xf32, #tpu.memory_space<vmem>>, vector<32x128xf32>,
    } else {
    }
    return
  }
  func.func @transform_0(%arg0: i32, %arg1: i32, %arg2: i32) -> (i32, i32) {
    %c0_i32 = arith.constant 0 : i32
    return %arg0, %arg2 : i32, i32
  }
  func.func @transform_1(%arg0: i32, %arg1: i32, %arg2: i32) -> (i32, i32) {
    %c0_i32 = arith.constant 0 : i32
    return %arg2, %arg1 : i32, i32
  }
  func.func @transform_2(%arg0: i32, %arg1: i32, %arg2: i32) -> (i32, i32) {
    %c0_i32 = arith.constant 0 : i32
    %c0_i32_0 = arith.constant 0 : i32
    return %c0_i32, %arg1 : i32, i32
  }
  func.func @transform_3(%arg0: i32, %arg1: i32, %arg2: i32) -> (i32, i32) {
    %c0_i32 = arith.constant 0 : i32
    return %arg0, %arg1 : i32, i32
  }
}

module attributes {stable_mosaic.version = 11 : i64} {
  func.func @_mm_bn_res_kernel(%arg0: i32, %arg1: i32, %arg2: i32, %arg3: memref<32x384xbf16, #tpu.memory_space<vmem>>, %arg4: memref<384x128xbf16, #tpu.memory_space<vmem>>, %arg5: memref<1x128xf32, #tpu.memory_space<vmem>>, %arg6: memref<32x128xf32, #tpu.memory_space<vmem>>, %arg7: memref<32x128xf32, #tpu.memory_space<vmem>>, %arg8: memref<32x128xf32, #tpu.memory_space<vmem>>) attributes {dimension_semantics = [#tpu.dimension_semantics<parallel>, #tpu.dimension_semantics<parallel>, #tpu.dimension_semantics<arbitrary>], iteration_bounds = array<i64: 1, 1, 1>, scalar_prefetch = 0 : i64, scratch_operands = 1 : i64, tpu.core_type = #tpu.core_type<tc>, window_params = [{transform_indices = @transform_0, window_bounds = array<i64: 32, 384>}, {transform_indices = @transform_1, window_bounds = array<i64: 384, 128>}, {transform_indices = @transform_2, window_bounds = array<i64: 1, 128>}, {transform_indices = @transform_3, window_bounds = array<i64: 32, 128>}, {transform_indices = @transform_4, window_bounds = array<i64: 32, 128>}]} {
    %c0_i32 = arith.constant 0 : i32
    %0 = arith.cmpi eq, %arg2, %c0_i32 : i32
    %1 = arith.extui %0 : i1 to i32
    %c0_i32_0 = arith.constant 0 : i32
    %2 = arith.cmpi ne, %1, %c0_i32_0 : i32
    scf.if %2 {
      %cst_10 = arith.constant 0.000000e+00 : f32
      %12 = vector.broadcast %cst_10 : f32 to vector<32x128xf32>
      %c0_11 = arith.constant 0 : index
      %c0_12 = arith.constant 0 : index
      %13 = vector.load %arg8[%c0_11, %c0_12] : memref<32x128xf32, #tpu.memory_space<vmem>>, vector<32x128xf32>
      tpu.vector_store %arg8[%c0_11, %c0_12], %12 {strides = array<i32>} : memref<32x128xf32, #tpu.memory_space<vmem>>, vector<32x128xf32>,
    } else {
    }
    %c0 = arith.constant 0 : index
    %c0_1 = arith.constant 0 : index
    %3 = vector.load %arg8[%c0, %c0_1] : memref<32x128xf32, #tpu.memory_space<vmem>>, vector<32x128xf32>
    %c0_2 = arith.constant 0 : index
    %c0_3 = arith.constant 0 : index
    %4 = vector.load %arg3[%c0_2, %c0_3] : memref<32x384xbf16, #tpu.memory_space<vmem>>, vector<32x384xbf16>
    %c0_4 = arith.constant 0 : index
    %c0_5 = arith.constant 0 : index
    %5 = vector.load %arg4[%c0_4, %c0_5] : memref<384x128xbf16, #tpu.memory_space<vmem>>, vector<384x128xbf16>
    %cst = arith.constant dense<0.000000e+00> : vector<32x128xf32>
    %6 = tpu.matmul %4, %5, %cst {dimension_numbers = #tpu.dot_dimension_numbers<[1], [0], [0], [1], [0, 0, 1, 1], [], []>} : vector<32x384xbf16>, vector<384x128xbf16>, vector<32x128xf32> -> vector<32x128xf32>
    %7 = arith.addf %3, %6 : vector<32x128xf32>
    %c0_6 = arith.constant 0 : index
    %c0_7 = arith.constant 0 : index
    %8 = vector.load %arg8[%c0_6, %c0_7] : memref<32x128xf32, #tpu.memory_space<vmem>>, vector<32x128xf32>
    tpu.vector_store %arg8[%c0_6, %c0_7], %7 {strides = array<i32>} : memref<32x128xf32, #tpu.memory_space<vmem>>, vector<32x128xf32>,
    %c0_i32_8 = arith.constant 0 : i32
    %9 = arith.cmpi eq, %arg2, %c0_i32_8 : i32
    %10 = arith.extui %9 : i1 to i32
    %c0_i32_9 = arith.constant 0 : i32
    %11 = arith.cmpi ne, %10, %c0_i32_9 : i32
    scf.if %11 {
      %c0_10 = arith.constant 0 : index
      %c0_11 = arith.constant 0 : index
      %12 = vector.load %arg8[%c0_10, %c0_11] : memref<32x128xf32, #tpu.memory_space<vmem>>, vector<32x128xf32>
      %c0_12 = arith.constant 0 : index
      %c0_13 = arith.constant 0 : index
      %13 = vector.load %arg5[%c0_12, %c0_13] : memref<1x128xf32, #tpu.memory_space<vmem>>, vector<1x128xf32>
      %14 = vector.broadcast %13 : vector<1x128xf32> to vector<32x128xf32>
      %15 = arith.addf %12, %14 : vector<32x128xf32>
      %c0_14 = arith.constant 0 : index
      %c0_15 = arith.constant 0 : index
      %16 = vector.load %arg6[%c0_14, %c0_15] : memref<32x128xf32, #tpu.memory_space<vmem>>, vector<32x128xf32>
      %17 = arith.addf %15, %16 : vector<32x128xf32>
      %cst_16 = arith.constant 0.000000e+00 : f32
      %18 = vector.broadcast %cst_16 : f32 to vector<32x128xf32>
      %19 = arith.maximumf %17, %18 : vector<32x128xf32>
      %c0_17 = arith.constant 0 : index
      %c0_18 = arith.constant 0 : index
      %20 = vector.load %arg7[%c0_17, %c0_18] : memref<32x128xf32, #tpu.memory_space<vmem>>, vector<32x128xf32>
      tpu.vector_store %arg7[%c0_17, %c0_18], %19 {strides = array<i32>} : memref<32x128xf32, #tpu.memory_space<vmem>>, vector<32x128xf32>,
    } else {
    }
    return
  }
  func.func @transform_0(%arg0: i32, %arg1: i32, %arg2: i32) -> (i32, i32) {
    %c0_i32 = arith.constant 0 : i32
    return %arg0, %arg2 : i32, i32
  }
  func.func @transform_1(%arg0: i32, %arg1: i32, %arg2: i32) -> (i32, i32) {
    %c0_i32 = arith.constant 0 : i32
    return %arg2, %arg1 : i32, i32
  }
  func.func @transform_2(%arg0: i32, %arg1: i32, %arg2: i32) -> (i32, i32) {
    %c0_i32 = arith.constant 0 : i32
    %c0_i32_0 = arith.constant 0 : i32
    return %c0_i32, %arg1 : i32, i32
  }
  func.func @transform_3(%arg0: i32, %arg1: i32, %arg2: i32) -> (i32, i32) {
    %c0_i32 = arith.constant 0 : i32
    return %arg0, %arg1 : i32, i32
  }
  func.func @transform_4(%arg0: i32, %arg1: i32, %arg2: i32) -> (i32, i32) {
    %c0_i32 = arith.constant 0 : i32
    return %arg0, %arg1 : i32, i32
  }
}

module attributes {stable_mosaic.version = 11 : i64} {
  func.func @_mm_bn_kernel(%arg0: i32, %arg1: i32, %arg2: i32, %arg3: memref<16x384xbf16, #tpu.memory_space<vmem>>, %arg4: memref<384x128xbf16, #tpu.memory_space<vmem>>, %arg5: memref<1x128xf32, #tpu.memory_space<vmem>>, %arg6: memref<16x128xf32, #tpu.memory_space<vmem>>, %arg7: memref<16x128xf32, #tpu.memory_space<vmem>>) attributes {dimension_semantics = [#tpu.dimension_semantics<parallel>, #tpu.dimension_semantics<parallel>, #tpu.dimension_semantics<arbitrary>], iteration_bounds = array<i64: 1, 1, 1>, scalar_prefetch = 0 : i64, scratch_operands = 1 : i64, tpu.core_type = #tpu.core_type<tc>, window_params = [{transform_indices = @transform_0, window_bounds = array<i64: 16, 384>}, {transform_indices = @transform_1, window_bounds = array<i64: 384, 128>}, {transform_indices = @transform_2, window_bounds = array<i64: 1, 128>}, {transform_indices = @transform_3, window_bounds = array<i64: 16, 128>}]} {
    %c0_i32 = arith.constant 0 : i32
    %0 = arith.cmpi eq, %arg2, %c0_i32 : i32
    %1 = arith.extui %0 : i1 to i32
    %c0_i32_0 = arith.constant 0 : i32
    %2 = arith.cmpi ne, %1, %c0_i32_0 : i32
    scf.if %2 {
      %cst_10 = arith.constant 0.000000e+00 : f32
      %12 = vector.broadcast %cst_10 : f32 to vector<16x128xf32>
      %c0_11 = arith.constant 0 : index
      %c0_12 = arith.constant 0 : index
      %13 = vector.load %arg7[%c0_11, %c0_12] : memref<16x128xf32, #tpu.memory_space<vmem>>, vector<16x128xf32>
      tpu.vector_store %arg7[%c0_11, %c0_12], %12 {strides = array<i32>} : memref<16x128xf32, #tpu.memory_space<vmem>>, vector<16x128xf32>,
    } else {
    }
    %c0 = arith.constant 0 : index
    %c0_1 = arith.constant 0 : index
    %3 = vector.load %arg7[%c0, %c0_1] : memref<16x128xf32, #tpu.memory_space<vmem>>, vector<16x128xf32>
    %c0_2 = arith.constant 0 : index
    %c0_3 = arith.constant 0 : index
    %4 = vector.load %arg3[%c0_2, %c0_3] : memref<16x384xbf16, #tpu.memory_space<vmem>>, vector<16x384xbf16>
    %c0_4 = arith.constant 0 : index
    %c0_5 = arith.constant 0 : index
    %5 = vector.load %arg4[%c0_4, %c0_5] : memref<384x128xbf16, #tpu.memory_space<vmem>>, vector<384x128xbf16>
    %cst = arith.constant dense<0.000000e+00> : vector<16x128xf32>
    %6 = tpu.matmul %4, %5, %cst {dimension_numbers = #tpu.dot_dimension_numbers<[1], [0], [0], [1], [0, 0, 1, 1], [], []>} : vector<16x384xbf16>, vector<384x128xbf16>, vector<16x128xf32> -> vector<16x128xf32>
    %7 = arith.addf %3, %6 : vector<16x128xf32>
    %c0_6 = arith.constant 0 : index
    %c0_7 = arith.constant 0 : index
    %8 = vector.load %arg7[%c0_6, %c0_7] : memref<16x128xf32, #tpu.memory_space<vmem>>, vector<16x128xf32>
    tpu.vector_store %arg7[%c0_6, %c0_7], %7 {strides = array<i32>} : memref<16x128xf32, #tpu.memory_space<vmem>>, vector<16x128xf32>,
    %c0_i32_8 = arith.constant 0 : i32
    %9 = arith.cmpi eq, %arg2, %c0_i32_8 : i32
    %10 = arith.extui %9 : i1 to i32
    %c0_i32_9 = arith.constant 0 : i32
    %11 = arith.cmpi ne, %10, %c0_i32_9 : i32
    scf.if %11 {
      %c0_10 = arith.constant 0 : index
      %c0_11 = arith.constant 0 : index
      %12 = vector.load %arg7[%c0_10, %c0_11] : memref<16x128xf32, #tpu.memory_space<vmem>>, vector<16x128xf32>
      %c0_12 = arith.constant 0 : index
      %c0_13 = arith.constant 0 : index
      %13 = vector.load %arg5[%c0_12, %c0_13] : memref<1x128xf32, #tpu.memory_space<vmem>>, vector<1x128xf32>
      %14 = vector.broadcast %13 : vector<1x128xf32> to vector<16x128xf32>
      %15 = arith.addf %12, %14 : vector<16x128xf32>
      %cst_14 = arith.constant 0.000000e+00 : f32
      %16 = vector.broadcast %cst_14 : f32 to vector<16x128xf32>
      %17 = arith.maximumf %15, %16 : vector<16x128xf32>
      %c0_15 = arith.constant 0 : index
      %c0_16 = arith.constant 0 : index
      %18 = vector.load %arg6[%c0_15, %c0_16] : memref<16x128xf32, #tpu.memory_space<vmem>>, vector<16x128xf32>
      tpu.vector_store %arg6[%c0_15, %c0_16], %17 {strides = array<i32>} : memref<16x128xf32, #tpu.memory_space<vmem>>, vector<16x128xf32>,
    } else {
    }
    return
  }
  func.func @transform_0(%arg0: i32, %arg1: i32, %arg2: i32) -> (i32, i32) {
    %c0_i32 = arith.constant 0 : i32
    return %arg0, %arg2 : i32, i32
  }
  func.func @transform_1(%arg0: i32, %arg1: i32, %arg2: i32) -> (i32, i32) {
    %c0_i32 = arith.constant 0 : i32
    return %arg2, %arg1 : i32, i32
  }
  func.func @transform_2(%arg0: i32, %arg1: i32, %arg2: i32) -> (i32, i32) {
    %c0_i32 = arith.constant 0 : i32
    %c0_i32_0 = arith.constant 0 : i32
    return %c0_i32, %arg1 : i32, i32
  }
  func.func @transform_3(%arg0: i32, %arg1: i32, %arg2: i32) -> (i32, i32) {
    %c0_i32 = arith.constant 0 : i32
    return %arg0, %arg1 : i32, i32
  }
}

module attributes {stable_mosaic.version = 11 : i64} {
  func.func @_mm_bn_kernel(%arg0: i32, %arg1: i32, %arg2: i32, %arg3: memref<16x128xbf16, #tpu.memory_space<vmem>>, %arg4: memref<128x128xbf16, #tpu.memory_space<vmem>>, %arg5: memref<1x128xf32, #tpu.memory_space<vmem>>, %arg6: memref<16x128xf32, #tpu.memory_space<vmem>>, %arg7: memref<16x128xf32, #tpu.memory_space<vmem>>) attributes {dimension_semantics = [#tpu.dimension_semantics<parallel>, #tpu.dimension_semantics<parallel>, #tpu.dimension_semantics<arbitrary>], iteration_bounds = array<i64: 1, 1, 1>, scalar_prefetch = 0 : i64, scratch_operands = 1 : i64, tpu.core_type = #tpu.core_type<tc>, window_params = [{transform_indices = @transform_0, window_bounds = array<i64: 16, 128>}, {transform_indices = @transform_1, window_bounds = array<i64: 128, 128>}, {transform_indices = @transform_2, window_bounds = array<i64: 1, 128>}, {transform_indices = @transform_3, window_bounds = array<i64: 16, 128>}]} {
    %c0_i32 = arith.constant 0 : i32
    %0 = arith.cmpi eq, %arg2, %c0_i32 : i32
    %1 = arith.extui %0 : i1 to i32
    %c0_i32_0 = arith.constant 0 : i32
    %2 = arith.cmpi ne, %1, %c0_i32_0 : i32
    scf.if %2 {
      %cst_10 = arith.constant 0.000000e+00 : f32
      %12 = vector.broadcast %cst_10 : f32 to vector<16x128xf32>
      %c0_11 = arith.constant 0 : index
      %c0_12 = arith.constant 0 : index
      %13 = vector.load %arg7[%c0_11, %c0_12] : memref<16x128xf32, #tpu.memory_space<vmem>>, vector<16x128xf32>
      tpu.vector_store %arg7[%c0_11, %c0_12], %12 {strides = array<i32>} : memref<16x128xf32, #tpu.memory_space<vmem>>, vector<16x128xf32>,
    } else {
    }
    %c0 = arith.constant 0 : index
    %c0_1 = arith.constant 0 : index
    %3 = vector.load %arg7[%c0, %c0_1] : memref<16x128xf32, #tpu.memory_space<vmem>>, vector<16x128xf32>
    %c0_2 = arith.constant 0 : index
    %c0_3 = arith.constant 0 : index
    %4 = vector.load %arg3[%c0_2, %c0_3] : memref<16x128xbf16, #tpu.memory_space<vmem>>, vector<16x128xbf16>
    %c0_4 = arith.constant 0 : index
    %c0_5 = arith.constant 0 : index
    %5 = vector.load %arg4[%c0_4, %c0_5] : memref<128x128xbf16, #tpu.memory_space<vmem>>, vector<128x128xbf16>
    %cst = arith.constant dense<0.000000e+00> : vector<16x128xf32>
    %6 = tpu.matmul %4, %5, %cst {dimension_numbers = #tpu.dot_dimension_numbers<[1], [0], [0], [1], [0, 0, 1, 1], [], []>} : vector<16x128xbf16>, vector<128x128xbf16>, vector<16x128xf32> -> vector<16x128xf32>
    %7 = arith.addf %3, %6 : vector<16x128xf32>
    %c0_6 = arith.constant 0 : index
    %c0_7 = arith.constant 0 : index
    %8 = vector.load %arg7[%c0_6, %c0_7] : memref<16x128xf32, #tpu.memory_space<vmem>>, vector<16x128xf32>
    tpu.vector_store %arg7[%c0_6, %c0_7], %7 {strides = array<i32>} : memref<16x128xf32, #tpu.memory_space<vmem>>, vector<16x128xf32>,
    %c0_i32_8 = arith.constant 0 : i32
    %9 = arith.cmpi eq, %arg2, %c0_i32_8 : i32
    %10 = arith.extui %9 : i1 to i32
    %c0_i32_9 = arith.constant 0 : i32
    %11 = arith.cmpi ne, %10, %c0_i32_9 : i32
    scf.if %11 {
      %c0_10 = arith.constant 0 : index
      %c0_11 = arith.constant 0 : index
      %12 = vector.load %arg7[%c0_10, %c0_11] : memref<16x128xf32, #tpu.memory_space<vmem>>, vector<16x128xf32>
      %c0_12 = arith.constant 0 : index
      %c0_13 = arith.constant 0 : index
      %13 = vector.load %arg5[%c0_12, %c0_13] : memref<1x128xf32, #tpu.memory_space<vmem>>, vector<1x128xf32>
      %14 = vector.broadcast %13 : vector<1x128xf32> to vector<16x128xf32>
      %15 = arith.addf %12, %14 : vector<16x128xf32>
      %c0_14 = arith.constant 0 : index
      %c0_15 = arith.constant 0 : index
      %16 = vector.load %arg6[%c0_14, %c0_15] : memref<16x128xf32, #tpu.memory_space<vmem>>, vector<16x128xf32>
      tpu.vector_store %arg6[%c0_14, %c0_15], %15 {strides = array<i32>} : memref<16x128xf32, #tpu.memory_space<vmem>>, vector<16x128xf32>,
    } else {
    }
    return
  }
  func.func @transform_0(%arg0: i32, %arg1: i32, %arg2: i32) -> (i32, i32) {
    %c0_i32 = arith.constant 0 : i32
    return %arg0, %arg2 : i32, i32
  }
  func.func @transform_1(%arg0: i32, %arg1: i32, %arg2: i32) -> (i32, i32) {
    %c0_i32 = arith.constant 0 : i32
    return %arg2, %arg1 : i32, i32
  }
  func.func @transform_2(%arg0: i32, %arg1: i32, %arg2: i32) -> (i32, i32) {
    %c0_i32 = arith.constant 0 : i32
    %c0_i32_0 = arith.constant 0 : i32
    return %c0_i32, %arg1 : i32, i32
  }
  func.func @transform_3(%arg0: i32, %arg1: i32, %arg2: i32) -> (i32, i32) {
    %c0_i32 = arith.constant 0 : i32
    return %arg0, %arg1 : i32, i32
  }
}

module attributes {stable_mosaic.version = 11 : i64} {
  func.func @_mm_bn_res_kernel(%arg0: i32, %arg1: i32, %arg2: i32, %arg3: memref<16x384xbf16, #tpu.memory_space<vmem>>, %arg4: memref<384x128xbf16, #tpu.memory_space<vmem>>, %arg5: memref<1x128xf32, #tpu.memory_space<vmem>>, %arg6: memref<16x128xf32, #tpu.memory_space<vmem>>, %arg7: memref<16x128xf32, #tpu.memory_space<vmem>>, %arg8: memref<16x128xf32, #tpu.memory_space<vmem>>) attributes {dimension_semantics = [#tpu.dimension_semantics<parallel>, #tpu.dimension_semantics<parallel>, #tpu.dimension_semantics<arbitrary>], iteration_bounds = array<i64: 1, 1, 1>, scalar_prefetch = 0 : i64, scratch_operands = 1 : i64, tpu.core_type = #tpu.core_type<tc>, window_params = [{transform_indices = @transform_0, window_bounds = array<i64: 16, 384>}, {transform_indices = @transform_1, window_bounds = array<i64: 384, 128>}, {transform_indices = @transform_2, window_bounds = array<i64: 1, 128>}, {transform_indices = @transform_3, window_bounds = array<i64: 16, 128>}, {transform_indices = @transform_4, window_bounds = array<i64: 16, 128>}]} {
    %c0_i32 = arith.constant 0 : i32
    %0 = arith.cmpi eq, %arg2, %c0_i32 : i32
    %1 = arith.extui %0 : i1 to i32
    %c0_i32_0 = arith.constant 0 : i32
    %2 = arith.cmpi ne, %1, %c0_i32_0 : i32
    scf.if %2 {
      %cst_10 = arith.constant 0.000000e+00 : f32
      %12 = vector.broadcast %cst_10 : f32 to vector<16x128xf32>
      %c0_11 = arith.constant 0 : index
      %c0_12 = arith.constant 0 : index
      %13 = vector.load %arg8[%c0_11, %c0_12] : memref<16x128xf32, #tpu.memory_space<vmem>>, vector<16x128xf32>
      tpu.vector_store %arg8[%c0_11, %c0_12], %12 {strides = array<i32>} : memref<16x128xf32, #tpu.memory_space<vmem>>, vector<16x128xf32>,
    } else {
    }
    %c0 = arith.constant 0 : index
    %c0_1 = arith.constant 0 : index
    %3 = vector.load %arg8[%c0, %c0_1] : memref<16x128xf32, #tpu.memory_space<vmem>>, vector<16x128xf32>
    %c0_2 = arith.constant 0 : index
    %c0_3 = arith.constant 0 : index
    %4 = vector.load %arg3[%c0_2, %c0_3] : memref<16x384xbf16, #tpu.memory_space<vmem>>, vector<16x384xbf16>
    %c0_4 = arith.constant 0 : index
    %c0_5 = arith.constant 0 : index
    %5 = vector.load %arg4[%c0_4, %c0_5] : memref<384x128xbf16, #tpu.memory_space<vmem>>, vector<384x128xbf16>
    %cst = arith.constant dense<0.000000e+00> : vector<16x128xf32>
    %6 = tpu.matmul %4, %5, %cst {dimension_numbers = #tpu.dot_dimension_numbers<[1], [0], [0], [1], [0, 0, 1, 1], [], []>} : vector<16x384xbf16>, vector<384x128xbf16>, vector<16x128xf32> -> vector<16x128xf32>
    %7 = arith.addf %3, %6 : vector<16x128xf32>
    %c0_6 = arith.constant 0 : index
    %c0_7 = arith.constant 0 : index
    %8 = vector.load %arg8[%c0_6, %c0_7] : memref<16x128xf32, #tpu.memory_space<vmem>>, vector<16x128xf32>
    tpu.vector_store %arg8[%c0_6, %c0_7], %7 {strides = array<i32>} : memref<16x128xf32, #tpu.memory_space<vmem>>, vector<16x128xf32>,
    %c0_i32_8 = arith.constant 0 : i32
    %9 = arith.cmpi eq, %arg2, %c0_i32_8 : i32
    %10 = arith.extui %9 : i1 to i32
    %c0_i32_9 = arith.constant 0 : i32
    %11 = arith.cmpi ne, %10, %c0_i32_9 : i32
    scf.if %11 {
      %c0_10 = arith.constant 0 : index
      %c0_11 = arith.constant 0 : index
      %12 = vector.load %arg8[%c0_10, %c0_11] : memref<16x128xf32, #tpu.memory_space<vmem>>, vector<16x128xf32>
      %c0_12 = arith.constant 0 : index
      %c0_13 = arith.constant 0 : index
      %13 = vector.load %arg5[%c0_12, %c0_13] : memref<1x128xf32, #tpu.memory_space<vmem>>, vector<1x128xf32>
      %14 = vector.broadcast %13 : vector<1x128xf32> to vector<16x128xf32>
      %15 = arith.addf %12, %14 : vector<16x128xf32>
      %c0_14 = arith.constant 0 : index
      %c0_15 = arith.constant 0 : index
      %16 = vector.load %arg6[%c0_14, %c0_15] : memref<16x128xf32, #tpu.memory_space<vmem>>, vector<16x128xf32>
      %17 = arith.addf %15, %16 : vector<16x128xf32>
      %cst_16 = arith.constant 0.000000e+00 : f32
      %18 = vector.broadcast %cst_16 : f32 to vector<16x128xf32>
      %19 = arith.maximumf %17, %18 : vector<16x128xf32>
      %c0_17 = arith.constant 0 : index
      %c0_18 = arith.constant 0 : index
      %20 = vector.load %arg7[%c0_17, %c0_18] : memref<16x128xf32, #tpu.memory_space<vmem>>, vector<16x128xf32>
      tpu.vector_store %arg7[%c0_17, %c0_18], %19 {strides = array<i32>} : memref<16x128xf32, #tpu.memory_space<vmem>>, vector<16x128xf32>,
    } else {
    }
    return
  }
  func.func @transform_0(%arg0: i32, %arg1: i32, %arg2: i32) -> (i32, i32) {
    %c0_i32 = arith.constant 0 : i32
    return %arg0, %arg2 : i32, i32
  }
  func.func @transform_1(%arg0: i32, %arg1: i32, %arg2: i32) -> (i32, i32) {
    %c0_i32 = arith.constant 0 : i32
    return %arg2, %arg1 : i32, i32
  }
  func.func @transform_2(%arg0: i32, %arg1: i32, %arg2: i32) -> (i32, i32) {
    %c0_i32 = arith.constant 0 : i32
    %c0_i32_0 = arith.constant 0 : i32
    return %c0_i32, %arg1 : i32, i32
  }
  func.func @transform_3(%arg0: i32, %arg1: i32, %arg2: i32) -> (i32, i32) {
    %c0_i32 = arith.constant 0 : i32
    return %arg0, %arg1 : i32, i32
  }
  func.func @transform_4(%arg0: i32, %arg1: i32, %arg2: i32) -> (i32, i32) {
    %c0_i32 = arith.constant 0 : i32
    return %arg0, %arg1 : i32, i32
  }
}

</mosaic_0001>

<llo_original>
// kernel: _lambda_.14
$region0: #{_lambda_.14}
  #allocation0 [shape = 'u32[]', space=smem, size = 0x4, offset = 0x4, fixed_abs, tag = 'smem constant byte address 0x4 - core index']
  #allocation1 [shape = 'u32[72,128]{1,0:T(1,128)}', space=vmem, size = 0x9000, scoped, tag = 'internal scratch']
  %s0 = inlined_call_operand.vmem [shape: f32[2,17,128], index: 0, kind: input, shape index: {}]
  %s1 = inlined_call_operand.vmem [shape: f32[2,16,128], index: 1, kind: input, shape index: {}]
  %s2 = inlined_call_operand.vmem [shape: f32[2,16,128], index: 2, kind: output, shape index: {}]
  %s3 = sld [smem:[#allocation0]]
  $region41: #{_lambda_.14} parent=0
    _
  %s5 = ssub.s32 1, %s3
  %s6 = scalar_select 0, %s5, %s3
  loop: start=0, step=1, limit=4
  $region2: #{_lambda_.14} parent=0 // loop_pre_header
    _
  $region3: #{_lambda_.14} parent=0 // loop_header
    %s8 = sphi 0, %s12
    %p9 = scmp.ge.s32.totalorder %s8, 4
    %s18 = sphi 0, %s20
    %s21 = sphi 0, %s18
    %s22 = sphi 0, %s21
    %s38 = sphi 0, %s22
    %s44 = sphi 0, %s46
    %s47 = sphi 0, %s44
    %s48 = sphi 0, %s47
    %s64 = sphi 0, %s48
    %s70 = sphi 0, %s72
    %s73 = sphi 0, %s70
    %s74 = sphi 0, %s73
    %s90 = sphi 0, %s74
  $region4: #{_lambda_.14} parent=0 // loop_header_branch
    %11 = sbr.rel (%p9) target = $region8
  $region5: #{_lambda_.14} parent=0 // loop_body
    %s13 = ssub.s32 %s8, 1
    %s14 = ssub.s32 %s8, 2
    %s15 = sadd.s32 %s8, 1
    %s16 = ssub.s32 %s8, %s15
    %p17 = scmp.eq.s32.totalorder %s16, 0
    %s19 = sadd.s32 %s18, 1
    %s20 = scalar_select %p17, %s18, %s19
    %p23 = pneg %p17
    %p24 = scmp.eq.s32.totalorder %s8, 1
    %p25 = por %p23, %p24
    %p26 = scmp.ne.s32.totalorder %s18, %s21
    %p27 = scmp.eq.s32.totalorder %s8, 0
    %p28 = por %p26, %p27
    %p29 = scmp.ne.s32.totalorder %s18, %s21
    %p30 = scmp.eq.s32.totalorder %s13, 1
    %p31 = por %p29, %p30
    %p32 = scmp.ne.s32.totalorder %s21, %s22
    %p33 = scmp.eq.s32.totalorder %s13, 0
    %p34 = por %p32, %p33
    %p35 = scmp.ne.s32.totalorder %s21, %s22
    %p36 = scmp.eq.s32.totalorder %s14, 1
    %p37 = por %p35, %p36
    %p39 = scmp.ne.s32.totalorder %s22, %s38
    %p40 = scmp.eq.s32.totalorder %s14, 0
    %p41 = por %p39, %p40
    %s42 = ssub.s32 %s8, %s15
    %p43 = scmp.eq.s32.totalorder %s42, 0
    %s45 = sadd.s32 %s44, 1
    %s46 = scalar_select %p43, %s44, %s45
    %p49 = pneg %p43
    %p50 = scmp.eq.s32.totalorder %s8, 1
    %p51 = por %p49, %p50
    %p52 = scmp.ne.s32.totalorder %s44, %s47
    %p53 = scmp.eq.s32.totalorder %s8, 0
    %p54 = por %p52, %p53
    %p55 = scmp.ne.s32.totalorder %s44, %s47
    %p56 = scmp.eq.s32.totalorder %s13, 1
    %p57 = por %p55, %p56
    %p58 = scmp.ne.s32.totalorder %s47, %s48
    %p59 = scmp.eq.s32.totalorder %s13, 0
    %p60 = por %p58, %p59
    %p61 = scmp.ne.s32.totalorder %s47, %s48
    %p62 = scmp.eq.s32.totalorder %s14, 1
    %p63 = por %p61, %p62
    %p65 = scmp.ne.s32.totalorder %s48, %s64
    %p66 = scmp.eq.s32.totalorder %s14, 0
    %p67 = por %p65, %p66
    %s68 = ssub.s32 %s8, %s15
    %p69 = scmp.eq.s32.totalorder %s68, 0
    %s71 = sadd.s32 %s70, 1
    %s72 = scalar_select %p69, %s70, %s71
    %p75 = pneg %p69
    %p76 = scmp.eq.s32.totalorder %s8, 1
    %p77 = por %p75, %p76
    %p78 = scmp.ne.s32.totalorder %s70, %s73
    %p79 = scmp.eq.s32.totalorder %s8, 0
    %p80 = por %p78, %p79
    %p81 = scmp.ne.s32.totalorder %s70, %s73
    %p82 = scmp.eq.s32.totalorder %s13, 1
    %p83 = por %p81, %p82
    %p84 = scmp.ne.s32.totalorder %s73, %s74
    %p85 = scmp.eq.s32.totalorder %s13, 0
    %p86 = por %p84, %p85
    %p87 = scmp.ne.s32.totalorder %s73, %s74
    %p88 = scmp.eq.s32.totalorder %s14, 1
    %p89 = por %p87, %p88
    %p91 = scmp.ne.s32.totalorder %s74, %s90
    %p92 = scmp.eq.s32.totalorder %s14, 0
    %p93 = por %p91, %p92
    %p94 = scmp.le.s32.totalorder 1, %s8
    %p95 = scmp.lt.s32.totalorder %s8, 3
    %p96 = pnand %p94, %p95
    %p97 = pneg %p96
    // Predicated region
    $region9: #{_lambda_.14} parent=5 // pred_check
      _
    $region10: #{_lambda_.14} parent=5 // pred_check_branch
      %99 = sbr.rel (%p96) target = $region12
    $region11: #{_lambda_.14} parent=5 // pred_region
      %s100 = ssub.s32 %s8, 1
    $region12: #{_lambda_.14} parent=5 // pred_fallthru
      _
    %p101 = scmp.lt.s32.totalorder %s8, 2
    // Predicated region
    $region13: #{_lambda_.14} parent=5 // pred_check
      %p102 = pneg %p101
    $region14: #{_lambda_.14} parent=5 // pred_check_branch
      %104 = sbr.rel (%p102) target = $region16
    $region15: #{_lambda_.14} parent=5 // pred_region
      // Predicated region
      $region17: #{_lambda_.14} parent=15 // pred_check
        %p105 = pneg %p28
      $region18: #{_lambda_.14} parent=15 // pred_check_branch
        %107 = sbr.rel (%p105) target = $region20
      $region19: #{_lambda_.14} parent=15 // pred_region
        %p108 = scmp.lt.s32.totalorder %s8, 1
        %s109 = scalar_select %p108, %s8, 1
        %s110 = smul.addr %s109, 3
        %s111 = smul.addr %s110, 8
        %s112 = scalar_lea.vmem %s0, %s111
      $region20: #{_lambda_.14} parent=15 // pred_fallthru
        _
      // Predicated region
      $region21: #{_lambda_.14} parent=15 // pred_check
        %p113 = pneg %p54
      $region22: #{_lambda_.14} parent=15 // pred_check_branch
        %115 = sbr.rel (%p113) target = $region24
      $region23: #{_lambda_.14} parent=15 // pred_region
        %p116 = scmp.lt.s32.totalorder %s8, 1
        %s117 = scalar_select %p116, %s8, 1
        %s118 = smul.addr %s117, 2
        %s119 = smul.addr %s118, 8
        %s120 = scalar_lea.vmem %s1, %s119
      $region24: #{_lambda_.14} parent=15 // pred_fallthru
        _
    $region16: #{_lambda_.14} parent=5 // pred_fallthru
      _
    %p121 = scmp.le.s32.totalorder 1, %s8
    %p122 = scmp.lt.s32.totalorder %s8, 3
    %p123 = pnand %p121, %p122
    %p124 = pneg %p123
    // Predicated region
    $region25: #{_lambda_.14} parent=5 // pred_check
      _
    $region26: #{_lambda_.14} parent=5 // pred_check_branch
      %126 = sbr.rel (%p123) target = $region28
    $region27: #{_lambda_.14} parent=5 // pred_region
      %s127 = ssub.s32 %s8, 1
      %p128 = scmp.lt.s32.totalorder %s13, 1
      %s129 = scalar_select %p128, %s13, 1
      %s130 = smul.addr %s129, 3
      %s131 = smul.addr %s130, 8
      %s132 = scalar_lea.vmem %s0, %s131
      %p133 = pneg %p34
      %p134 = pneg %p31
      %p135 = scmp.lt.s32.totalorder %s13, 1
      %s136 = scalar_select %p135, %s13, 1
      %s137 = smul.addr %s136, 2
      %s138 = smul.addr %s137, 8
      %s139 = scalar_lea.vmem %s1, %s138
      %p140 = pneg %p60
      %p141 = pneg %p57
      %p142 = pneg %p86
      %p143 = pneg %p83
      %p144 = scmp.lt.s32.totalorder %s13, 1
      %s145 = scalar_select %p144, %s13, 1
      %s146 = smul.addr %s145, 2
      %s147 = smul.addr %s146, 8
      %s148 = scalar_lea.vmem %s2, %s147
      %p149 = scmp.lt.s32.totalorder %s13, 1
      %s150 = scalar_select %p149, %s13, 1
      %s151 = smul.addr %s150, 3
      %s152 = smul.addr %s151, 8
      %s153 = scalar_lea.vmem %s0, %s152
      %p154 = scmp.lt.s32.totalorder %s13, 1
      %s155 = scalar_select %p154, %s13, 1
      %s156 = smul.addr %s155, 2
      %s157 = smul.addr %s156, 8
      %s158 = scalar_lea.vmem %s1, %s157
      %p159 = scmp.lt.s32.totalorder %s13, 1
      %s160 = scalar_select %p159, %s13, 1
      %s161 = smul.addr %s160, 2
      %s162 = smul.addr %s161, 8
      %s163 = scalar_lea.vmem %s2, %s162
      %v164 = vld [vmem:[%s153] sm:$0xff]
      %v165 = vld [vmem:[%s153 + $0x8] sm:$0xff]
      %v166 = vld [vmem:[%s153 + $0x10] sm:$0x1]
      %v167 = vld [vmem:[%s158] sm:$0xff]
      %v168 = vld [vmem:[%s158 + $0x8] sm:$0xff]
      %v169 = vmax.f32 %v164, %v167
      %v170 = vmax.f32 %v165, %v168
      %vm174 = vcmask 1046528
      %v175 = vrot.slane %v164, 1
      %v176 = vrot.slane %v165, 1
      %v177 = vsel %vm174, %v175, %v176
      %v178 = vrot.slane %v166, 1
      %v179 = vsel %vm174, %v176, %v178
      %v182 = vmax.f32 %v169, %v177
      %v183 = vmax.f32 %v170, %v179
      %184 = vst [vmem:[%s163] sm:$0xff] %v182
      %185 = vst [vmem:[%s163 + $0x8] sm:$0xff] %v183
      %p186 = scmp.lt.s32.totalorder %s13, 1
      %s187 = scalar_select %p186, %s13, 1
      %s188 = smul.addr %s187, 2
      %s189 = smul.addr %s188, 8
      %s190 = scalar_lea.vmem %s2, %s189
      // Predicated region
      $region29: #{_lambda_.14} parent=27 // pred_check
        %p191 = pneg %p83
      $region30: #{_lambda_.14} parent=27 // pred_check_branch
        %193 = sbr.rel (%p191) target = $region32
      $region31: #{_lambda_.14} parent=27 // pred_region
        _
      $region32: #{_lambda_.14} parent=27 // pred_fallthru
        _
    $region28: #{_lambda_.14} parent=5 // pred_fallthru
      _
    %p194 = scmp.le.s32.totalorder 2, %s8
    // Predicated region
    $region33: #{_lambda_.14} parent=5 // pred_check
      %p195 = pneg %p194
    $region34: #{_lambda_.14} parent=5 // pred_check_branch
      %197 = sbr.rel (%p195) target = $region36
    $region35: #{_lambda_.14} parent=5 // pred_region
      %s198 = ssub.s32 %s8, 2
      // Predicated region
      $region37: #{_lambda_.14} parent=35 // pred_check
        %p199 = pneg %p89
      $region38: #{_lambda_.14} parent=35 // pred_check_branch
        %201 = sbr.rel (%p199) target = $region40
      $region39: #{_lambda_.14} parent=35 // pred_region
        %p202 = scmp.lt.s32.totalorder %s14, 1
        %s203 = scalar_select %p202, %s14, 1
        %s204 = smul.addr %s203, 2
        %s205 = smul.addr %s204, 8
        %s206 = scalar_lea.vmem %s2, %s205
      $region40: #{_lambda_.14} parent=35 // pred_fallthru
        _
    $region36: #{_lambda_.14} parent=5 // pred_fallthru
      _
  $region6: #{_lambda_.14} parent=0 // loop_footer
    %s12 = sadd.s32 1, %s8
  $region7: #{_lambda_.14} parent=0 // loop_footer_branch
    %7 = sbr.rel target = $region3
  $region8: #{_lambda_.14} parent=0 // loop_exit
    _

// kernel: _lambda_.13
$region0: #{_lambda_.13}
  #allocation0 [shape = 'u32[]', space=smem, size = 0x4, offset = 0x4, fixed_abs, tag = 'smem constant byte address 0x4 - core index']
  #allocation1 [shape = 'u32[72,128]{1,0:T(1,128)}', space=vmem, size = 0x9000, scoped, tag = 'internal scratch']
  #allocation2 [shape = 'f32[64,128]{1,0:T(8,128)}', space=vmem, size = 0x8000, scoped, tag = 'scratch operand']
  %s0 = inlined_call_operand.vmem [shape: bf16[64,7], index: 0, kind: input, shape index: {}]
  %s1 = inlined_call_operand.vmem [shape: bf16[7,128], index: 1, kind: input, shape index: {}]
  %s2 = inlined_call_operand.vmem [shape: f32[1,128], index: 2, kind: input, shape index: {}]
  %s3 = inlined_call_operand.vmem [shape: f32[64,128], index: 3, kind: output, shape index: {}]
  %s4 = sld [smem:[#allocation0]]
  $region30: #{_lambda_.13} parent=0
    _
  %s6 = ssub.s32 1, %s4
  %s7 = scalar_select 0, %s6, %s4
  // Predicated region
  $region2: #{_lambda_.13} parent=0 // pred_check
    _
  $region3: #{_lambda_.13} parent=0 // pred_check_branch
    %9 = sbr.rel (0) target = $region5
  $region4: #{_lambda_.13} parent=0 // pred_region
    _
  $region5: #{_lambda_.13} parent=0 // pred_fallthru
    _
  // Predicated region
  $region6: #{_lambda_.13} parent=0 // pred_check
    _
  $region7: #{_lambda_.13} parent=0 // pred_check_branch
    %11 = sbr.rel (0) target = $region9
  $region8: #{_lambda_.13} parent=0 // pred_region
    _
  $region9: #{_lambda_.13} parent=0 // pred_fallthru
    _
  // Predicated region
  $region10: #{_lambda_.13} parent=0 // pred_check
    _
  $region11: #{_lambda_.13} parent=0 // pred_check_branch
    %13 = sbr.rel (0) target = $region13
  $region12: #{_lambda_.13} parent=0 // pred_region
    _
  $region13: #{_lambda_.13} parent=0 // pred_fallthru
    _
  %p15 = scmp.eq.s32.totalorder 0, 0
  // Predicated region
  $region14: #{_lambda_.13} parent=0 // pred_check
    %p16 = pneg %p15
  $region15: #{_lambda_.13} parent=0 // pred_check_branch
    %18 = sbr.rel (%p16) target = $region17
  $region16: #{_lambda_.13} parent=0 // pred_region
    %19 = vst [vmem:[#allocation2] sm:$0xff] 0.0
    %20 = vst [vmem:[#allocation2 + $0x8] sm:$0xff] 0.0
    %21 = vst [vmem:[#allocation2 + $0x10] sm:$0xff] 0.0
    %22 = vst [vmem:[#allocation2 + $0x18] sm:$0xff] 0.0
    %23 = vst [vmem:[#allocation2 + $0x20] sm:$0xff] 0.0
    %24 = vst [vmem:[#allocation2 + $0x28] sm:$0xff] 0.0
    %25 = vst [vmem:[#allocation2 + $0x30] sm:$0xff] 0.0
    %26 = vst [vmem:[#allocation2 + $0x38] sm:$0xff] 0.0
  $region17: #{_lambda_.13} parent=0 // pred_fallthru
    _
  %v27 = vld [vmem:[#allocation2] sm:$0xff]
  %v28 = vld [vmem:[#allocation2 + $0x8] sm:$0xff]
  %v29 = vld [vmem:[#allocation2 + $0x10] sm:$0xff]
  %v30 = vld [vmem:[#allocation2 + $0x18] sm:$0xff]
  %v31 = vld [vmem:[#allocation2 + $0x20] sm:$0xff]
  %v32 = vld [vmem:[#allocation2 + $0x28] sm:$0xff]
  %v33 = vld [vmem:[#allocation2 + $0x30] sm:$0xff]
  %v34 = vld [vmem:[#allocation2 + $0x38] sm:$0xff]
  %v35 = vld [vmem:[%s0] sm:$0xf]
  %v36 = vld [vmem:[%s0 + $0x4] sm:$0xf]
  %v37 = vld [vmem:[%s0 + $0x8] sm:$0xf]
  %v38 = vld [vmem:[%s0 + $0xc] sm:$0xf]
  %v39 = vld [vmem:[%s0 + $0x10] sm:$0xf]
  %v40 = vld [vmem:[%s0 + $0x14] sm:$0xf]
  %v41 = vld [vmem:[%s0 + $0x18] sm:$0xf]
  %v42 = vld [vmem:[%s0 + $0x1c] sm:$0xf]
  %v43 = vld [vmem:[%s1] sm:$0xf]
  %v52 = vunpack.c.l.b16 %v35
  %v53 = vunpack.c.l.b16 %v36
  %v54 = vunpack.c.l.b16 %v37
  %v55 = vunpack.c.l.b16 %v38
  %v56 = vunpack.c.l.b16 %v39
  %v57 = vunpack.c.l.b16 %v40
  %v58 = vunpack.c.l.b16 %v41
  %v59 = vunpack.c.l.b16 %v42
  %v60 = vpack.c.b16 %v53, %v52
  %v61 = vpack.c.b16 %v55, %v54
  %v62 = vpack.c.b16 %v57, %v56
  %v63 = vpack.c.b16 %v59, %v58
  %vm64 = vcmask 56320
  %v66 = vsel %vm64, %v60, 0
  %v69 = vsel %vm64, %v61, 0
  %v72 = vsel %vm64, %v62, 0
  %v75 = vsel %vm64, %v63, 0
  %vm77 = vcmask 1042432
  %vm78 = vcmask 1043456
  %v79 = vsel %vm77, 4294967295, 65535
  %v80 = vsel %vm78, %v79, 0
  %v82 = vand.u32 %v43, %v80
  %84 = vmatpush.bf16.msra.mxu0 0
  %85 = vmatpush.bf16.msra.mxu0 0
  %86 = vmatpush.bf16.msra.mxu0 0
  %87 = vmatpush.bf16.msra.mxu0 0
  %88 = vmatpush.bf16.msra.mxu0 0
  %89 = vmatpush.bf16.msra.mxu0 0
  %90 = vmatpush.bf16.msra.mxu0 0
  %91 = vmatpush.bf16.msra.mxu0 %v82
  %92 = vmatmul.bf16.gmra.mxu0 %v66
  %v93 = vpop.f32.mrf.mxu0
  %v94 = vadd.f32 0.0, %v93
  %v95 = vpop.f32.mrf.mxu0
  %v96 = vadd.f32 0.0, %v95
  %97 = vmatmul.bf16.gmra.mxu0 %v69
  %v98 = vpop.f32.mrf.mxu0
  %v99 = vadd.f32 0.0, %v98
  %v100 = vpop.f32.mrf.mxu0
  %v101 = vadd.f32 0.0, %v100
  %102 = vmatmul.bf16.gmra.mxu0 %v72
  %v103 = vpop.f32.mrf.mxu0
  %v104 = vadd.f32 0.0, %v103
  %v105 = vpop.f32.mrf.mxu0
  %v106 = vadd.f32 0.0, %v105
  %107 = vmatmul.bf16.gmra.mxu0 %v75
  %v108 = vpop.f32.mrf.mxu0
  %v109 = vadd.f32 0.0, %v108
  %v110 = vpop.f32.mrf.mxu0
  %v111 = vadd.f32 0.0, %v110
  %112 = vdwg.mxu0
  %v113 = vadd.f32 %v27, %v94
  %v114 = vadd.f32 %v28, %v96
  %v115 = vadd.f32 %v29, %v99
  %v116 = vadd.f32 %v30, %v101
  %v117 = vadd.f32 %v31, %v104
  %v118 = vadd.f32 %v32, %v106
  %v119 = vadd.f32 %v33, %v109
  %v120 = vadd.f32 %v34, %v111
  %121 = vst [vmem:[#allocation2] sm:$0xff] %v113
  %122 = vst [vmem:[#allocation2 + $0x8] sm:$0xff] %v114
  %123 = vst [vmem:[#allocation2 + $0x10] sm:$0xff] %v115
  %124 = vst [vmem:[#allocation2 + $0x18] sm:$0xff] %v116
  %125 = vst [vmem:[#allocation2 + $0x20] sm:$0xff] %v117
  %126 = vst [vmem:[#allocation2 + $0x28] sm:$0xff] %v118
  %127 = vst [vmem:[#allocation2 + $0x30] sm:$0xff] %v119
  %128 = vst [vmem:[#allocation2 + $0x38] sm:$0xff] %v120
  // Predicated region
  $region18: #{_lambda_.13} parent=0 // pred_check
    %p129 = pneg %p15
  $region19: #{_lambda_.13} parent=0 // pred_check_branch
    %131 = sbr.rel (%p129) target = $region21
  $region20: #{_lambda_.13} parent=0 // pred_region
    %v132 = vld [vmem:[#allocation2] sm:$0xff]
    %v133 = vld [vmem:[#allocation2 + $0x8] sm:$0xff]
    %v134 = vld [vmem:[#allocation2 + $0x10] sm:$0xff]
    %v135 = vld [vmem:[#allocation2 + $0x18] sm:$0xff]
    %v136 = vld [vmem:[#allocation2 + $0x20] sm:$0xff]
    %v137 = vld [vmem:[#allocation2 + $0x28] sm:$0xff]
    %v138 = vld [vmem:[#allocation2 + $0x30] sm:$0xff]
    %v139 = vld [vmem:[#allocation2 + $0x38] sm:$0xff]
    %v140 = vld [vmem:[%s2] sm:$0x1]
    %v142 = vperm.slane %v140, 0
    %v144 = vadd.f32 %v132, %v142
    %v145 = vadd.f32 %v133, %v142
    %v146 = vadd.f32 %v134, %v142
    %v147 = vadd.f32 %v135, %v142
    %v148 = vadd.f32 %v136, %v142
    %v149 = vadd.f32 %v137, %v142
    %v150 = vadd.f32 %v138, %v142
    %v151 = vadd.f32 %v139, %v142
    %v152 = vmax.f32 %v144, 0.0
    %v153 = vmax.f32 %v145, 0.0
    %v154 = vmax.f32 %v146, 0.0
    %v155 = vmax.f32 %v147, 0.0
    %v156 = vmax.f32 %v148, 0.0
    %v157 = vmax.f32 %v149, 0.0
    %v158 = vmax.f32 %v150, 0.0
    %v159 = vmax.f32 %v151, 0.0
    %160 = vst [vmem:[%s3] sm:$0xff] %v152
    %161 = vst [vmem:[%s3 + $0x8] sm:$0xff] %v153
    %162 = vst [vmem:[%s3 + $0x10] sm:$0xff] %v154
    %163 = vst [vmem:[%s3 + $0x18] sm:$0xff] %v155
    %164 = vst [vmem:[%s3 + $0x20] sm:$0xff] %v156
    %165 = vst [vmem:[%s3 + $0x28] sm:$0xff] %v157
    %166 = vst [vmem:[%s3 + $0x30] sm:$0xff] %v158
    %167 = vst [vmem:[%s3 + $0x38] sm:$0xff] %v159
  $region21: #{_lambda_.13} parent=0 // pred_fallthru
    _
  // Predicated region
  $region22: #{_lambda_.13} parent=0 // pred_check
    _
  $region23: #{_lambda_.13} parent=0 // pred_check_branch
    %169 = sbr.rel (0) target = $region25
  $region24: #{_lambda_.13} parent=0 // pred_region
    _
  $region25: #{_lambda_.13} parent=0 // pred_fallthru
    _
  // Predicated region
  $region26: #{_lambda_.13} parent=0 // pred_check
    _
  $region27: #{_lambda_.13} parent=0 // pred_check_branch
    %171 = sbr.rel (0) target = $region29
  $region28: #{_lambda_.13} parent=0 // pred_region
    _
  $region29: #{_lambda_.13} parent=0 // pred_fallthru
    _

// kernel: _lambda_.16
$region0: #{_lambda_.16}
  #allocation0 [shape = 'u32[]', space=smem, size = 0x4, offset = 0x4, fixed_abs, tag = 'smem constant byte address 0x4 - core index']
  #allocation1 [shape = 'u32[72,128]{1,0:T(1,128)}', space=vmem, size = 0x9000, scoped, tag = 'internal scratch']
  #allocation2 [shape = 'f32[32,128]{1,0:T(8,128)}', space=vmem, size = 0x4000, scoped, tag = 'scratch operand']
  %s0 = inlined_call_operand.vmem [shape: bf16[32,384], index: 0, kind: input, shape index: {}]
  %s1 = inlined_call_operand.vmem [shape: bf16[384,128], index: 1, kind: input, shape index: {}]
  %s2 = inlined_call_operand.vmem [shape: f32[1,128], index: 2, kind: input, shape index: {}]
  %s3 = inlined_call_operand.vmem [shape: f32[32,128], index: 3, kind: input, shape index: {}]
  %s4 = inlined_call_operand.vmem [shape: f32[32,128], index: 4, kind: output, shape index: {}]
  %s5 = sld [smem:[#allocation0]]
  $region34: #{_lambda_.16} parent=0
    _
  %s7 = ssub.s32 1, %s5
  %s8 = scalar_select 0, %s7, %s5
  // Predicated region
  $region2: #{_lambda_.16} parent=0 // pred_check
    _
  $region3: #{_lambda_.16} parent=0 // pred_check_branch
    %10 = sbr.rel (0) target = $region5
  $region4: #{_lambda_.16} parent=0 // pred_region
    _
  $region5: #{_lambda_.16} parent=0 // pred_fallthru
    _
  // Predicated region
  $region6: #{_lambda_.16} parent=0 // pred_check
    _
  $region7: #{_lambda_.16} parent=0 // pred_check_branch
    %12 = sbr.rel (0) target = $region9
  $region8: #{_lambda_.16} parent=0 // pred_region
    _
  $region9: #{_lambda_.16} parent=0 // pred_fallthru
    _
  // Predicated region
  $region10: #{_lambda_.16} parent=0 // pred_check
    _
  $region11: #{_lambda_.16} parent=0 // pred_check_branch
    %14 = sbr.rel (0) target = $region13
  $region12: #{_lambda_.16} parent=0 // pred_region
    _
  $region13: #{_lambda_.16} parent=0 // pred_fallthru
    _
  // Predicated region
  $region14: #{_lambda_.16} parent=0 // pred_check
    _
  $region15: #{_lambda_.16} parent=0 // pred_check_branch
    %16 = sbr.rel (0) target = $region17
  $region16: #{_lambda_.16} parent=0 // pred_region
    _
  $region17: #{_lambda_.16} parent=0 // pred_fallthru
    _
  %p17 = scmp.eq.s32.totalorder 0, 0
  // Predicated region
  $region18: #{_lambda_.16} parent=0 // pred_check
    %p18 = pneg %p17
  $region19: #{_lambda_.16} parent=0 // pred_check_branch
    %20 = sbr.rel (%p18) target = $region21
  $region20: #{_lambda_.16} parent=0 // pred_region
    %21 = vst [vmem:[#allocation2] sm:$0xff] 0.0
    %22 = vst [vmem:[#allocation2 + $0x8] sm:$0xff] 0.0
    %23 = vst [vmem:[#allocation2 + $0x10] sm:$0xff] 0.0
    %24 = vst [vmem:[#allocation2 + $0x18] sm:$0xff] 0.0
  $region21: #{_lambda_.16} parent=0 // pred_fallthru
    _
  %v25 = vld [vmem:[#allocation2] sm:$0xff]
  %v26 = vld [vmem:[#allocation2 + $0x8] sm:$0xff]
  %v27 = vld [vmem:[#allocation2 + $0x10] sm:$0xff]
  %v28 = vld [vmem:[#allocation2 + $0x18] sm:$0xff]
  %v29 = vld [vmem:[%s0] sm:$0xff]
  %v30 = vld [vmem:[%s0 + $0x8] sm:$0xf]
  %v31 = vld [vmem:[%s0 + $0xc] sm:$0xff]
  %v32 = vld [vmem:[%s0 + $0x14] sm:$0xf]
  %v33 = vld [vmem:[%s0 + $0x18] sm:$0xff]
  %v34 = vld [vmem:[%s0 + $0x20] sm:$0xf]
  %v35 = vld [vmem:[%s0 + $0x24] sm:$0xff]
  %v36 = vld [vmem:[%s0 + $0x2c] sm:$0xf]
  %v37 = vld [vmem:[%s1] sm:$0xf]
  %v38 = vld [vmem:[%s1 + $0x4] sm:$0xf]
  %v39 = vld [vmem:[%s1 + $0x8] sm:$0xf]
  %v40 = vld [vmem:[%s1 + $0xc] sm:$0xf]
  %v41 = vld [vmem:[%s1 + $0x10] sm:$0xf]
  %v42 = vld [vmem:[%s1 + $0x14] sm:$0xf]
  %v43 = vld [vmem:[%s1 + $0x18] sm:$0xf]
  %v44 = vld [vmem:[%s1 + $0x1c] sm:$0xf]
  %v45 = vld [vmem:[%s1 + $0x20] sm:$0xf]
  %v46 = vld [vmem:[%s1 + $0x24] sm:$0xf]
  %v47 = vld [vmem:[%s1 + $0x28] sm:$0xf]
  %v48 = vld [vmem:[%s1 + $0x2c] sm:$0xf]
  %v49 = vld [vmem:[%s1 + $0x30] sm:$0xf]
  %v50 = vld [vmem:[%s1 + $0x34] sm:$0xf]
  %v51 = vld [vmem:[%s1 + $0x38] sm:$0xf]
  %v52 = vld [vmem:[%s1 + $0x3c] sm:$0xf]
  %v53 = vld [vmem:[%s1 + $0x40] sm:$0xf]
  %v54 = vld [vmem:[%s1 + $0x44] sm:$0xf]
  %v55 = vld [vmem:[%s1 + $0x48] sm:$0xf]
  %v56 = vld [vmem:[%s1 + $0x4c] sm:$0xf]
  %v57 = vld [vmem:[%s1 + $0x50] sm:$0xf]
  %v58 = vld [vmem:[%s1 + $0x54] sm:$0xf]
  %v59 = vld [vmem:[%s1 + $0x58] sm:$0xf]
  %v60 = vld [vmem:[%s1 + $0x5c] sm:$0xf]
  %v61 = vld [vmem:[%s1 + $0x60] sm:$0xf]
  %v62 = vld [vmem:[%s1 + $0x64] sm:$0xf]
  %v63 = vld [vmem:[%s1 + $0x68] sm:$0xf]
  %v64 = vld [vmem:[%s1 + $0x6c] sm:$0xf]
  %v65 = vld [vmem:[%s1 + $0x70] sm:$0xf]
  %v66 = vld [vmem:[%s1 + $0x74] sm:$0xf]
  %v67 = vld [vmem:[%s1 + $0x78] sm:$0xf]
  %v68 = vld [vmem:[%s1 + $0x7c] sm:$0xf]
  %v69 = vld [vmem:[%s1 + $0x80] sm:$0xf]
  %v70 = vld [vmem:[%s1 + $0x84] sm:$0xf]
  %v71 = vld [vmem:[%s1 + $0x88] sm:$0xf]
  %v72 = vld [vmem:[%s1 + $0x8c] sm:$0xf]
  %v73 = vld [vmem:[%s1 + $0x90] sm:$0xf]
  %v74 = vld [vmem:[%s1 + $0x94] sm:$0xf]
  %v75 = vld [vmem:[%s1 + $0x98] sm:$0xf]
  %v76 = vld [vmem:[%s1 + $0x9c] sm:$0xf]
  %v77 = vld [vmem:[%s1 + $0xa0] sm:$0xf]
  %v78 = vld [vmem:[%s1 + $0xa4] sm:$0xf]
  %v79 = vld [vmem:[%s1 + $0xa8] sm:$0xf]
  %v80 = vld [vmem:[%s1 + $0xac] sm:$0xf]
  %v81 = vld [vmem:[%s1 + $0xb0] sm:$0xf]
  %v82 = vld [vmem:[%s1 + $0xb4] sm:$0xf]
  %v83 = vld [vmem:[%s1 + $0xb8] sm:$0xf]
  %v84 = vld [vmem:[%s1 + $0xbc] sm:$0xf]
  %v93 = vunpack.c.l.b16 %v29
  %v94 = vunpack.c.h.b16 %v29
  %v95 = vunpack.c.l.b16 %v30
  %v96 = vunpack.c.l.b16 %v31
  %v97 = vunpack.c.h.b16 %v31
  %v98 = vunpack.c.l.b16 %v32
  %v99 = vunpack.c.l.b16 %v33
  %v100 = vunpack.c.h.b16 %v33
  %v101 = vunpack.c.l.b16 %v34
  %v102 = vunpack.c.l.b16 %v35
  %v103 = vunpack.c.h.b16 %v35
  %v104 = vunpack.c.l.b16 %v36
  %v105 = vpack.c.b16 %v96, %v93
  %v106 = vpack.c.b16 %v97, %v94
  %v107 = vpack.c.b16 %v98, %v95
  %v108 = vpack.c.b16 %v102, %v99
  %v109 = vpack.c.b16 %v103, %v100
  %v110 = vpack.c.b16 %v104, %v101
  %v165 = vunpack.c.l.b16 %v37
  %v166 = vunpack.c.l.b16 %v38
  %v167 = vunpack.c.l.b16 %v39
  %v168 = vunpack.c.l.b16 %v40
  %v169 = vunpack.c.l.b16 %v41
  %v170 = vunpack.c.l.b16 %v42
  %v171 = vunpack.c.l.b16 %v43
  %v172 = vunpack.c.l.b16 %v44
  %v173 = vunpack.c.l.b16 %v45
  %v174 = vunpack.c.l.b16 %v46
  %v175 = vunpack.c.l.b16 %v47
  %v176 = vunpack.c.l.b16 %v48
  %v177 = vunpack.c.l.b16 %v49
  %v178 = vunpack.c.l.b16 %v50
  %v179 = vunpack.c.l.b16 %v51
  %v180 = vunpack.c.l.b16 %v52
  %v181 = vunpack.c.l.b16 %v53
  %v182 = vunpack.c.l.b16 %v54
  %v183 = vunpack.c.l.b16 %v55
  %v184 = vunpack.c.l.b16 %v56
  %v185 = vunpack.c.l.b16 %v57
  %v186 = vunpack.c.l.b16 %v58
  %v187 = vunpack.c.l.b16 %v59
  %v188 = vunpack.c.l.b16 %v60
  %v189 = vunpack.c.l.b16 %v61
  %v190 = vunpack.c.l.b16 %v62
  %v191 = vunpack.c.l.b16 %v63
  %v192 = vunpack.c.l.b16 %v64
  %v193 = vunpack.c.l.b16 %v65
  %v194 = vunpack.c.l.b16 %v66
  %v195 = vunpack.c.l.b16 %v67
  %v196 = vunpack.c.l.b16 %v68
  %v197 = vunpack.c.l.b16 %v69
  %v198 = vunpack.c.l.b16 %v70
  %v199 = vunpack.c.l.b16 %v71
  %v200 = vunpack.c.l.b16 %v72
  %v201 = vunpack.c.l.b16 %v73
  %v202 = vunpack.c.l.b16 %v74
  %v203 = vunpack.c.l.b16 %v75
  %v204 = vunpack.c.l.b16 %v76
  %v205 = vunpack.c.l.b16 %v77
  %v206 = vunpack.c.l.b16 %v78
  %v207 = vunpack.c.l.b16 %v79
  %v208 = vunpack.c.l.b16 %v80
  %v209 = vunpack.c.l.b16 %v81
  %v210 = vunpack.c.l.b16 %v82
  %v211 = vunpack.c.l.b16 %v83
  %v212 = vunpack.c.l.b16 %v84
  %v213 = vpack.c.b16 %v166, %v165
  %v214 = vpack.c.b16 %v168, %v167
  %v215 = vpack.c.b16 %v170, %v169
  %v216 = vpack.c.b16 %v172, %v171
  %v217 = vpack.c.b16 %v174, %v173
  %v218 = vpack.c.b16 %v176, %v175
  %v219 = vpack.c.b16 %v178, %v177
  %v220 = vpack.c.b16 %v180, %v179
  %v221 = vpack.c.b16 %v182, %v181
  %v222 = vpack.c.b16 %v184, %v183
  %v223 = vpack.c.b16 %v186, %v185
  %v224 = vpack.c.b16 %v188, %v187
  %v225 = vpack.c.b16 %v190, %v189
  %v226 = vpack.c.b16 %v192, %v191
  %v227 = vpack.c.b16 %v194, %v193
  %v228 = vpack.c.b16 %v196, %v195
  %v229 = vpack.c.b16 %v198, %v197
  %v230 = vpack.c.b16 %v200, %v199
  %v231 = vpack.c.b16 %v202, %v201
  %v232 = vpack.c.b16 %v204, %v203
  %v233 = vpack.c.b16 %v206, %v205
  %v234 = vpack.c.b16 %v208, %v207
  %v235 = vpack.c.b16 %v210, %v209
  %v236 = vpack.c.b16 %v212, %v211
  %261 = vmatpush.bf16.msra.mxu0 %v220
  %262 = vmatpush.bf16.msra.mxu0 %v219
  %263 = vmatpush.bf16.msra.mxu0 %v218
  %264 = vmatpush.bf16.msra.mxu0 %v217
  %265 = vmatpush.bf16.msra.mxu0 %v216
  %266 = vmatpush.bf16.msra.mxu0 %v215
  %267 = vmatpush.bf16.msra.mxu0 %v214
  %268 = vmatpush.bf16.msra.mxu0 %v213
  %269 = vmatmul.bf16.gmra.mxu0 %v105
  %v270 = vpop.f32.mrf.mxu0
  %v271 = vadd.f32 0.0, %v270
  %v272 = vpop.f32.mrf.mxu0
  %v273 = vadd.f32 0.0, %v272
  %274 = vmatmul.bf16.gmra.mxu0 %v108
  %v275 = vpop.f32.mrf.mxu0
  %v276 = vadd.f32 0.0, %v275
  %v277 = vpop.f32.mrf.mxu0
  %v278 = vadd.f32 0.0, %v277
  %279 = vdwg.mxu0
  %280 = vmatpush.bf16.msra.mxu0 %v228
  %281 = vmatpush.bf16.msra.mxu0 %v227
  %282 = vmatpush.bf16.msra.mxu0 %v226
  %283 = vmatpush.bf16.msra.mxu0 %v225
  %284 = vmatpush.bf16.msra.mxu0 %v224
  %285 = vmatpush.bf16.msra.mxu0 %v223
  %286 = vmatpush.bf16.msra.mxu0 %v222
  %287 = vmatpush.bf16.msra.mxu0 %v221
  %288 = vmatmul.bf16.gmra.mxu0 %v106
  %v289 = vpop.f32.mrf.mxu0
  %v290 = vadd.f32 %v271, %v289
  %v291 = vpop.f32.mrf.mxu0
  %v292 = vadd.f32 %v273, %v291
  %293 = vmatmul.bf16.gmra.mxu0 %v109
  %v294 = vpop.f32.mrf.mxu0
  %v295 = vadd.f32 %v276, %v294
  %v296 = vpop.f32.mrf.mxu0
  %v297 = vadd.f32 %v278, %v296
  %298 = vdwg.mxu0
  %299 = vmatpush.bf16.msra.mxu0 %v236
  %300 = vmatpush.bf16.msra.mxu0 %v235
  %301 = vmatpush.bf16.msra.mxu0 %v234
  %302 = vmatpush.bf16.msra.mxu0 %v233
  %303 = vmatpush.bf16.msra.mxu0 %v232
  %304 = vmatpush.bf16.msra.mxu0 %v231
  %305 = vmatpush.bf16.msra.mxu0 %v230
  %306 = vmatpush.bf16.msra.mxu0 %v229
  %307 = vmatmul.bf16.gmra.mxu0 %v107
  %v308 = vpop.f32.mrf.mxu0
  %v309 = vadd.f32 %v290, %v308
  %v310 = vpop.f32.mrf.mxu0
  %v311 = vadd.f32 %v292, %v310
  %312 = vmatmul.bf16.gmra.mxu0 %v110
  %v313 = vpop.f32.mrf.mxu0
  %v314 = vadd.f32 %v295, %v313
  %v315 = vpop.f32.mrf.mxu0
  %v316 = vadd.f32 %v297, %v315
  %317 = vdwg.mxu0
  %v318 = vadd.f32 %v25, %v309
  %v319 = vadd.f32 %v26, %v311
  %v320 = vadd.f32 %v27, %v314
  %v321 = vadd.f32 %v28, %v316
  %322 = vst [vmem:[#allocation2] sm:$0xff] %v318
  %323 = vst [vmem:[#allocation2 + $0x8] sm:$0xff] %v319
  %324 = vst [vmem:[#allocation2 + $0x10] sm:$0xff] %v320
  %325 = vst [vmem:[#allocation2 + $0x18] sm:$0xff] %v321
  // Predicated region
  $region22: #{_lambda_.16} parent=0 // pred_check
    %p326 = pneg %p17
  $region23: #{_lambda_.16} parent=0 // pred_check_branch
    %328 = sbr.rel (%p326) target = $region25
  $region24: #{_lambda_.16} parent=0 // pred_region
    %v329 = vld [vmem:[#allocation2] sm:$0xff]
    %v330 = vld [vmem:[#allocation2 + $0x8] sm:$0xff]
    %v331 = vld [vmem:[#allocation2 + $0x10] sm:$0xff]
    %v332 = vld [vmem:[#allocation2 + $0x18] sm:$0xff]
    %v333 = vld [vmem:[%s2] sm:$0x1]
    %v335 = vperm.slane %v333, 0
    %v337 = vadd.f32 %v329, %v335
    %v338 = vadd.f32 %v330, %v335
    %v339 = vadd.f32 %v331, %v335
    %v340 = vadd.f32 %v332, %v335
    %v341 = vld [vmem:[%s3] sm:$0xff]
    %v342 = vld [vmem:[%s3 + $0x8] sm:$0xff]
    %v343 = vld [vmem:[%s3 + $0x10] sm:$0xff]
    %v344 = vld [vmem:[%s3 + $0x18] sm:$0xff]
    %v345 = vadd.f32 %v337, %v341
    %v346 = vadd.f32 %v338, %v342
    %v347 = vadd.f32 %v339, %v343
    %v348 = vadd.f32 %v340, %v344
    %v349 = vmax.f32 %v345, 0.0
    %v350 = vmax.f32 %v346, 0.0
    %v351 = vmax.f32 %v347, 0.0
    %v352 = vmax.f32 %v348, 0.0
    %353 = vst [vmem:[%s4] sm:$0xff] %v349
    %354 = vst [vmem:[%s4 + $0x8] sm:$0xff] %v350
    %355 = vst [vmem:[%s4 + $0x10] sm:$0xff] %v351
    %356 = vst [vmem:[%s4 + $0x18] sm:$0xff] %v352
  $region25: #{_lambda_.16} parent=0 // pred_fallthru
    _
  // Predicated region
  $region26: #{_lambda_.16} parent=0 // pred_check
    _
  $region27: #{_lambda_.16} parent=0 // pred_check_branch
    %358 = sbr.rel (0) target = $region29
  $region28: #{_lambda_.16} parent=0 // pred_region
    _
  $region29: #{_lambda_.16} parent=0 // pred_fallthru
    _
  // Predicated region
  $region30: #{_lambda_.16} parent=0 // pred_check
    _
  $region31: #{_lambda_.16} parent=0 // pred_check_branch
    %360 = sbr.rel (0) target = $region33
  $region32: #{_lambda_.16} parent=0 // pred_region
    _
  $region33: #{_lambda_.16} parent=0 // pred_fallthru
    _

// kernel: _lambda_.15
$region0: #{_lambda_.15}
  #allocation0 [shape = 'u32[]', space=smem, size = 0x4, offset = 0x4, fixed_abs, tag = 'smem constant byte address 0x4 - core index']
  #allocation1 [shape = 'u32[72,128]{1,0:T(1,128)}', space=vmem, size = 0x9000, scoped, tag = 'internal scratch']
  #allocation2 [shape = 'f32[32,128]{1,0:T(8,128)}', space=vmem, size = 0x4000, scoped, tag = 'scratch operand']
  %s0 = inlined_call_operand.vmem [shape: bf16[32,384], index: 0, kind: input, shape index: {}]
  %s1 = inlined_call_operand.vmem [shape: bf16[384,128], index: 1, kind: input, shape index: {}]
  %s2 = inlined_call_operand.vmem [shape: f32[1,128], index: 2, kind: input, shape index: {}]
  %s3 = inlined_call_operand.vmem [shape: f32[32,128], index: 3, kind: output, shape index: {}]
  %s4 = sld [smem:[#allocation0]]
  $region30: #{_lambda_.15} parent=0
    _
  %s6 = ssub.s32 1, %s4
  %s7 = scalar_select 0, %s6, %s4
  // Predicated region
  $region2: #{_lambda_.15} parent=0 // pred_check
    _
  $region3: #{_lambda_.15} parent=0 // pred_check_branch
    %9 = sbr.rel (0) target = $region5
  $region4: #{_lambda_.15} parent=0 // pred_region
    _
  $region5: #{_lambda_.15} parent=0 // pred_fallthru
    _
  // Predicated region
  $region6: #{_lambda_.15} parent=0 // pred_check
    _
  $region7: #{_lambda_.15} parent=0 // pred_check_branch
    %11 = sbr.rel (0) target = $region9
  $region8: #{_lambda_.15} parent=0 // pred_region
    _
  $region9: #{_lambda_.15} parent=0 // pred_fallthru
    _
  // Predicated region
  $region10: #{_lambda_.15} parent=0 // pred_check
    _
  $region11: #{_lambda_.15} parent=0 // pred_check_branch
    %13 = sbr.rel (0) target = $region13
  $region12: #{_lambda_.15} parent=0 // pred_region
    _
  $region13: #{_lambda_.15} parent=0 // pred_fallthru
    _
  %p14 = scmp.eq.s32.totalorder 0, 0
  // Predicated region
  $region14: #{_lambda_.15} parent=0 // pred_check
    %p15 = pneg %p14
  $region15: #{_lambda_.15} parent=0 // pred_check_branch
    %17 = sbr.rel (%p15) target = $region17
  $region16: #{_lambda_.15} parent=0 // pred_region
    %18 = vst [vmem:[#allocation2] sm:$0xff] 0.0
    %19 = vst [vmem:[#allocation2 + $0x8] sm:$0xff] 0.0
    %20 = vst [vmem:[#allocation2 + $0x10] sm:$0xff] 0.0
    %21 = vst [vmem:[#allocation2 + $0x18] sm:$0xff] 0.0
  $region17: #{_lambda_.15} parent=0 // pred_fallthru
    _
  %v22 = vld [vmem:[#allocation2] sm:$0xff]
  %v23 = vld [vmem:[#allocation2 + $0x8] sm:$0xff]
  %v24 = vld [vmem:[#allocation2 + $0x10] sm:$0xff]
  %v25 = vld [vmem:[#allocation2 + $0x18] sm:$0xff]
  %v26 = vld [vmem:[%s0] sm:$0xff]
  %v27 = vld [vmem:[%s0 + $0x8] sm:$0xf]
  %v28 = vld [vmem:[%s0 + $0xc] sm:$0xff]
  %v29 = vld [vmem:[%s0 + $0x14] sm:$0xf]
  %v30 = vld [vmem:[%s0 + $0x18] sm:$0xff]
  %v31 = vld [vmem:[%s0 + $0x20] sm:$0xf]
  %v32 = vld [vmem:[%s0 + $0x24] sm:$0xff]
  %v33 = vld [vmem:[%s0 + $0x2c] sm:$0xf]
  %v34 = vld [vmem:[%s1] sm:$0xf]
  %v35 = vld [vmem:[%s1 + $0x4] sm:$0xf]
  %v36 = vld [vmem:[%s1 + $0x8] sm:$0xf]
  %v37 = vld [vmem:[%s1 + $0xc] sm:$0xf]
  %v38 = vld [vmem:[%s1 + $0x10] sm:$0xf]
  %v39 = vld [vmem:[%s1 + $0x14] sm:$0xf]
  %v40 = vld [vmem:[%s1 + $0x18] sm:$0xf]
  %v41 = vld [vmem:[%s1 + $0x1c] sm:$0xf]
  %v42 = vld [vmem:[%s1 + $0x20] sm:$0xf]
  %v43 = vld [vmem:[%s1 + $0x24] sm:$0xf]
  %v44 = vld [vmem:[%s1 + $0x28] sm:$0xf]
  %v45 = vld [vmem:[%s1 + $0x2c] sm:$0xf]
  %v46 = vld [vmem:[%s1 + $0x30] sm:$0xf]
  %v47 = vld [vmem:[%s1 + $0x34] sm:$0xf]
  %v48 = vld [vmem:[%s1 + $0x38] sm:$0xf]
  %v49 = vld [vmem:[%s1 + $0x3c] sm:$0xf]
  %v50 = vld [vmem:[%s1 + $0x40] sm:$0xf]
  %v51 = vld [vmem:[%s1 + $0x44] sm:$0xf]
  %v52 = vld [vmem:[%s1 + $0x48] sm:$0xf]
  %v53 = vld [vmem:[%s1 + $0x4c] sm:$0xf]
  %v54 = vld [vmem:[%s1 + $0x50] sm:$0xf]
  %v55 = vld [vmem:[%s1 + $0x54] sm:$0xf]
  %v56 = vld [vmem:[%s1 + $0x58] sm:$0xf]
  %v57 = vld [vmem:[%s1 + $0x5c] sm:$0xf]
  %v58 = vld [vmem:[%s1 + $0x60] sm:$0xf]
  %v59 = vld [vmem:[%s1 + $0x64] sm:$0xf]
  %v60 = vld [vmem:[%s1 + $0x68] sm:$0xf]
  %v61 = vld [vmem:[%s1 + $0x6c] sm:$0xf]
  %v62 = vld [vmem:[%s1 + $0x70] sm:$0xf]
  %v63 = vld [vmem:[%s1 + $0x74] sm:$0xf]
  %v64 = vld [vmem:[%s1 + $0x78] sm:$0xf]
  %v65 = vld [vmem:[%s1 + $0x7c] sm:$0xf]
  %v66 = vld [vmem:[%s1 + $0x80] sm:$0xf]
  %v67 = vld [vmem:[%s1 + $0x84] sm:$0xf]
  %v68 = vld [vmem:[%s1 + $0x88] sm:$0xf]
  %v69 = vld [vmem:[%s1 + $0x8c] sm:$0xf]
  %v70 = vld [vmem:[%s1 + $0x90] sm:$0xf]
  %v71 = vld [vmem:[%s1 + $0x94] sm:$0xf]
  %v72 = vld [vmem:[%s1 + $0x98] sm:$0xf]
  %v73 = vld [vmem:[%s1 + $0x9c] sm:$0xf]
  %v74 = vld [vmem:[%s1 + $0xa0] sm:$0xf]
  %v75 = vld [vmem:[%s1 + $0xa4] sm:$0xf]
  %v76 = vld [vmem:[%s1 + $0xa8] sm:$0xf]
  %v77 = vld [vmem:[%s1 + $0xac] sm:$0xf]
  %v78 = vld [vmem:[%s1 + $0xb0] sm:$0xf]
  %v79 = vld [vmem:[%s1 + $0xb4] sm:$0xf]
  %v80 = vld [vmem:[%s1 + $0xb8] sm:$0xf]
  %v81 = vld [vmem:[%s1 + $0xbc] sm:$0xf]
  %v90 = vunpack.c.l.b16 %v26
  %v91 = vunpack.c.h.b16 %v26
  %v92 = vunpack.c.l.b16 %v27
  %v93 = vunpack.c.l.b16 %v28
  %v94 = vunpack.c.h.b16 %v28
  %v95 = vunpack.c.l.b16 %v29
  %v96 = vunpack.c.l.b16 %v30
  %v97 = vunpack.c.h.b16 %v30
  %v98 = vunpack.c.l.b16 %v31
  %v99 = vunpack.c.l.b16 %v32
  %v100 = vunpack.c.h.b16 %v32
  %v101 = vunpack.c.l.b16 %v33
  %v102 = vpack.c.b16 %v93, %v90
  %v103 = vpack.c.b16 %v94, %v91
  %v104 = vpack.c.b16 %v95, %v92
  %v105 = vpack.c.b16 %v99, %v96
  %v106 = vpack.c.b16 %v100, %v97
  %v107 = vpack.c.b16 %v101, %v98
  %v162 = vunpack.c.l.b16 %v34
  %v163 = vunpack.c.l.b16 %v35
  %v164 = vunpack.c.l.b16 %v36
  %v165 = vunpack.c.l.b16 %v37
  %v166 = vunpack.c.l.b16 %v38
  %v167 = vunpack.c.l.b16 %v39
  %v168 = vunpack.c.l.b16 %v40
  %v169 = vunpack.c.l.b16 %v41
  %v170 = vunpack.c.l.b16 %v42
  %v171 = vunpack.c.l.b16 %v43
  %v172 = vunpack.c.l.b16 %v44
  %v173 = vunpack.c.l.b16 %v45
  %v174 = vunpack.c.l.b16 %v46
  %v175 = vunpack.c.l.b16 %v47
  %v176 = vunpack.c.l.b16 %v48
  %v177 = vunpack.c.l.b16 %v49
  %v178 = vunpack.c.l.b16 %v50
  %v179 = vunpack.c.l.b16 %v51
  %v180 = vunpack.c.l.b16 %v52
  %v181 = vunpack.c.l.b16 %v53
  %v182 = vunpack.c.l.b16 %v54
  %v183 = vunpack.c.l.b16 %v55
  %v184 = vunpack.c.l.b16 %v56
  %v185 = vunpack.c.l.b16 %v57
  %v186 = vunpack.c.l.b16 %v58
  %v187 = vunpack.c.l.b16 %v59
  %v188 = vunpack.c.l.b16 %v60
  %v189 = vunpack.c.l.b16 %v61
  %v190 = vunpack.c.l.b16 %v62
  %v191 = vunpack.c.l.b16 %v63
  %v192 = vunpack.c.l.b16 %v64
  %v193 = vunpack.c.l.b16 %v65
  %v194 = vunpack.c.l.b16 %v66
  %v195 = vunpack.c.l.b16 %v67
  %v196 = vunpack.c.l.b16 %v68
  %v197 = vunpack.c.l.b16 %v69
  %v198 = vunpack.c.l.b16 %v70
  %v199 = vunpack.c.l.b16 %v71
  %v200 = vunpack.c.l.b16 %v72
  %v201 = vunpack.c.l.b16 %v73
  %v202 = vunpack.c.l.b16 %v74
  %v203 = vunpack.c.l.b16 %v75
  %v204 = vunpack.c.l.b16 %v76
  %v205 = vunpack.c.l.b16 %v77
  %v206 = vunpack.c.l.b16 %v78
  %v207 = vunpack.c.l.b16 %v79
  %v208 = vunpack.c.l.b16 %v80
  %v209 = vunpack.c.l.b16 %v81
  %v210 = vpack.c.b16 %v163, %v162
  %v211 = vpack.c.b16 %v165, %v164
  %v212 = vpack.c.b16 %v167, %v166
  %v213 = vpack.c.b16 %v169, %v168
  %v214 = vpack.c.b16 %v171, %v170
  %v215 = vpack.c.b16 %v173, %v172
  %v216 = vpack.c.b16 %v175, %v174
  %v217 = vpack.c.b16 %v177, %v176
  %v218 = vpack.c.b16 %v179, %v178
  %v219 = vpack.c.b16 %v181, %v180
  %v220 = vpack.c.b16 %v183, %v182
  %v221 = vpack.c.b16 %v185, %v184
  %v222 = vpack.c.b16 %v187, %v186
  %v223 = vpack.c.b16 %v189, %v188
  %v224 = vpack.c.b16 %v191, %v190
  %v225 = vpack.c.b16 %v193, %v192
  %v226 = vpack.c.b16 %v195, %v194
  %v227 = vpack.c.b16 %v197, %v196
  %v228 = vpack.c.b16 %v199, %v198
  %v229 = vpack.c.b16 %v201, %v200
  %v230 = vpack.c.b16 %v203, %v202
  %v231 = vpack.c.b16 %v205, %v204
  %v232 = vpack.c.b16 %v207, %v206
  %v233 = vpack.c.b16 %v209, %v208
  %258 = vmatpush.bf16.msra.mxu0 %v217
  %259 = vmatpush.bf16.msra.mxu0 %v216
  %260 = vmatpush.bf16.msra.mxu0 %v215
  %261 = vmatpush.bf16.msra.mxu0 %v214
  %262 = vmatpush.bf16.msra.mxu0 %v213
  %263 = vmatpush.bf16.msra.mxu0 %v212
  %264 = vmatpush.bf16.msra.mxu0 %v211
  %265 = vmatpush.bf16.msra.mxu0 %v210
  %266 = vmatmul.bf16.gmra.mxu0 %v102
  %v267 = vpop.f32.mrf.mxu0
  %v268 = vadd.f32 0.0, %v267
  %v269 = vpop.f32.mrf.mxu0
  %v270 = vadd.f32 0.0, %v269
  %271 = vmatmul.bf16.gmra.mxu0 %v105
  %v272 = vpop.f32.mrf.mxu0
  %v273 = vadd.f32 0.0, %v272
  %v274 = vpop.f32.mrf.mxu0
  %v275 = vadd.f32 0.0, %v274
  %276 = vdwg.mxu0
  %277 = vmatpush.bf16.msra.mxu0 %v225
  %278 = vmatpush.bf16.msra.mxu0 %v224
  %279 = vmatpush.bf16.msra.mxu0 %v223
  %280 = vmatpush.bf16.msra.mxu0 %v222
  %281 = vmatpush.bf16.msra.mxu0 %v221
  %282 = vmatpush.bf16.msra.mxu0 %v220
  %283 = vmatpush.bf16.msra.mxu0 %v219
  %284 = vmatpush.bf16.msra.mxu0 %v218
  %285 = vmatmul.bf16.gmra.mxu0 %v103
  %v286 = vpop.f32.mrf.mxu0
  %v287 = vadd.f32 %v268, %v286
  %v288 = vpop.f32.mrf.mxu0
  %v289 = vadd.f32 %v270, %v288
  %290 = vmatmul.bf16.gmra.mxu0 %v106
  %v291 = vpop.f32.mrf.mxu0
  %v292 = vadd.f32 %v273, %v291
  %v293 = vpop.f32.mrf.mxu0
  %v294 = vadd.f32 %v275, %v293
  %295 = vdwg.mxu0
  %296 = vmatpush.bf16.msra.mxu0 %v233
  %297 = vmatpush.bf16.msra.mxu0 %v232
  %298 = vmatpush.bf16.msra.mxu0 %v231
  %299 = vmatpush.bf16.msra.mxu0 %v230
  %300 = vmatpush.bf16.msra.mxu0 %v229
  %301 = vmatpush.bf16.msra.mxu0 %v228
  %302 = vmatpush.bf16.msra.mxu0 %v227
  %303 = vmatpush.bf16.msra.mxu0 %v226
  %304 = vmatmul.bf16.gmra.mxu0 %v104
  %v305 = vpop.f32.mrf.mxu0
  %v306 = vadd.f32 %v287, %v305
  %v307 = vpop.f32.mrf.mxu0
  %v308 = vadd.f32 %v289, %v307
  %309 = vmatmul.bf16.gmra.mxu0 %v107
  %v310 = vpop.f32.mrf.mxu0
  %v311 = vadd.f32 %v292, %v310
  %v312 = vpop.f32.mrf.mxu0
  %v313 = vadd.f32 %v294, %v312
  %314 = vdwg.mxu0
  %v315 = vadd.f32 %v22, %v306
  %v316 = vadd.f32 %v23, %v308
  %v317 = vadd.f32 %v24, %v311
  %v318 = vadd.f32 %v25, %v313
  %319 = vst [vmem:[#allocation2] sm:$0xff] %v315
  %320 = vst [vmem:[#allocation2 + $0x8] sm:$0xff] %v316
  %321 = vst [vmem:[#allocation2 + $0x10] sm:$0xff] %v317
  %322 = vst [vmem:[#allocation2 + $0x18] sm:$0xff] %v318
  // Predicated region
  $region18: #{_lambda_.15} parent=0 // pred_check
    %p323 = pneg %p14
  $region19: #{_lambda_.15} parent=0 // pred_check_branch
    %325 = sbr.rel (%p323) target = $region21
  $region20: #{_lambda_.15} parent=0 // pred_region
    %v326 = vld [vmem:[#allocation2] sm:$0xff]
    %v327 = vld [vmem:[#allocation2 + $0x8] sm:$0xff]
    %v328 = vld [vmem:[#allocation2 + $0x10] sm:$0xff]
    %v329 = vld [vmem:[#allocation2 + $0x18] sm:$0xff]
    %v330 = vld [vmem:[%s2] sm:$0x1]
    %v332 = vperm.slane %v330, 0
    %v334 = vadd.f32 %v326, %v332
    %v335 = vadd.f32 %v327, %v332
    %v336 = vadd.f32 %v328, %v332
    %v337 = vadd.f32 %v329, %v332
    %v338 = vmax.f32 %v334, 0.0
    %v339 = vmax.f32 %v335, 0.0
    %v340 = vmax.f32 %v336, 0.0
    %v341 = vmax.f32 %v337, 0.0
    %342 = vst [vmem:[%s3] sm:$0xff] %v338
    %343 = vst [vmem:[%s3 + $0x8] sm:$0xff] %v339
    %344 = vst [vmem:[%s3 + $0x10] sm:$0xff] %v340
    %345 = vst [vmem:[%s3 + $0x18] sm:$0xff] %v341
  $region21: #{_lambda_.15} parent=0 // pred_fallthru
    _
  // Predicated region
  $region22: #{_lambda_.15} parent=0 // pred_check
    _
  $region23: #{_lambda_.15} parent=0 // pred_check_branch
    %347 = sbr.rel (0) target = $region25
  $region24: #{_lambda_.15} parent=0 // pred_region
    _
  $region25: #{_lambda_.15} parent=0 // pred_fallthru
    _
  // Predicated region
  $region26: #{_lambda_.15} parent=0 // pred_check
    _
  $region27: #{_lambda_.15} parent=0 // pred_check_branch
    %349 = sbr.rel (0) target = $region29
  $region28: #{_lambda_.15} parent=0 // pred_region
    _
  $region29: #{_lambda_.15} parent=0 // pred_fallthru
    _

// kernel: _lambda_.18
$region0: #{_lambda_.18}
  #allocation0 [shape = 'u32[]', space=smem, size = 0x4, offset = 0x4, fixed_abs, tag = 'smem constant byte address 0x4 - core index']
  #allocation1 [shape = 'u32[72,128]{1,0:T(1,128)}', space=vmem, size = 0x9000, scoped, tag = 'internal scratch']
  #allocation2 [shape = 'f32[16,128]{1,0:T(8,128)}', space=vmem, size = 0x2000, scoped, tag = 'scratch operand']
  %s0 = inlined_call_operand.vmem [shape: bf16[16,384], index: 0, kind: input, shape index: {}]
  %s1 = inlined_call_operand.vmem [shape: bf16[384,128], index: 1, kind: input, shape index: {}]
  %s2 = inlined_call_operand.vmem [shape: f32[1,128], index: 2, kind: input, shape index: {}]
  %s3 = inlined_call_operand.vmem [shape: f32[16,128], index: 3, kind: output, shape index: {}]
  %s4 = sld [smem:[#allocation0]]
  $region30: #{_lambda_.18} parent=0
    _
  %s6 = ssub.s32 1, %s4
  %s7 = scalar_select 0, %s6, %s4
  // Predicated region
  $region2: #{_lambda_.18} parent=0 // pred_check
    _
  $region3: #{_lambda_.18} parent=0 // pred_check_branch
    %9 = sbr.rel (0) target = $region5
  $region4: #{_lambda_.18} parent=0 // pred_region
    _
  $region5: #{_lambda_.18} parent=0 // pred_fallthru
    _
  // Predicated region
  $region6: #{_lambda_.18} parent=0 // pred_check
    _
  $region7: #{_lambda_.18} parent=0 // pred_check_branch
    %11 = sbr.rel (0) target = $region9
  $region8: #{_lambda_.18} parent=0 // pred_region
    _
  $region9: #{_lambda_.18} parent=0 // pred_fallthru
    _
  // Predicated region
  $region10: #{_lambda_.18} parent=0 // pred_check
    _
  $region11: #{_lambda_.18} parent=0 // pred_check_branch
    %13 = sbr.rel (0) target = $region13
  $region12: #{_lambda_.18} parent=0 // pred_region
    _
  $region13: #{_lambda_.18} parent=0 // pred_fallthru
    _
  %p14 = scmp.eq.s32.totalorder 0, 0
  // Predicated region
  $region14: #{_lambda_.18} parent=0 // pred_check
    %p15 = pneg %p14
  $region15: #{_lambda_.18} parent=0 // pred_check_branch
    %17 = sbr.rel (%p15) target = $region17
  $region16: #{_lambda_.18} parent=0 // pred_region
    %18 = vst [vmem:[#allocation2] sm:$0xff] 0.0
    %19 = vst [vmem:[#allocation2 + $0x8] sm:$0xff] 0.0
  $region17: #{_lambda_.18} parent=0 // pred_fallthru
    _
  %v20 = vld [vmem:[#allocation2] sm:$0xff]
  %v21 = vld [vmem:[#allocation2 + $0x8] sm:$0xff]
  %v22 = vld [vmem:[%s0] sm:$0xff]
  %v23 = vld [vmem:[%s0 + $0x8] sm:$0xf]
  %v24 = vld [vmem:[%s0 + $0xc] sm:$0xff]
  %v25 = vld [vmem:[%s0 + $0x14] sm:$0xf]
  %v26 = vld [vmem:[%s1] sm:$0xf]
  %v27 = vld [vmem:[%s1 + $0x4] sm:$0xf]
  %v28 = vld [vmem:[%s1 + $0x8] sm:$0xf]
  %v29 = vld [vmem:[%s1 + $0xc] sm:$0xf]
  %v30 = vld [vmem:[%s1 + $0x10] sm:$0xf]
  %v31 = vld [vmem:[%s1 + $0x14] sm:$0xf]
  %v32 = vld [vmem:[%s1 + $0x18] sm:$0xf]
  %v33 = vld [vmem:[%s1 + $0x1c] sm:$0xf]
  %v34 = vld [vmem:[%s1 + $0x20] sm:$0xf]
  %v35 = vld [vmem:[%s1 + $0x24] sm:$0xf]
  %v36 = vld [vmem:[%s1 + $0x28] sm:$0xf]
  %v37 = vld [vmem:[%s1 + $0x2c] sm:$0xf]
  %v38 = vld [vmem:[%s1 + $0x30] sm:$0xf]
  %v39 = vld [vmem:[%s1 + $0x34] sm:$0xf]
  %v40 = vld [vmem:[%s1 + $0x38] sm:$0xf]
  %v41 = vld [vmem:[%s1 + $0x3c] sm:$0xf]
  %v42 = vld [vmem:[%s1 + $0x40] sm:$0xf]
  %v43 = vld [vmem:[%s1 + $0x44] sm:$0xf]
  %v44 = vld [vmem:[%s1 + $0x48] sm:$0xf]
  %v45 = vld [vmem:[%s1 + $0x4c] sm:$0xf]
  %v46 = vld [vmem:[%s1 + $0x50] sm:$0xf]
  %v47 = vld [vmem:[%s1 + $0x54] sm:$0xf]
  %v48 = vld [vmem:[%s1 + $0x58] sm:$0xf]
  %v49 = vld [vmem:[%s1 + $0x5c] sm:$0xf]
  %v50 = vld [vmem:[%s1 + $0x60] sm:$0xf]
  %v51 = vld [vmem:[%s1 + $0x64] sm:$0xf]
  %v52 = vld [vmem:[%s1 + $0x68] sm:$0xf]
  %v53 = vld [vmem:[%s1 + $0x6c] sm:$0xf]
  %v54 = vld [vmem:[%s1 + $0x70] sm:$0xf]
  %v55 = vld [vmem:[%s1 + $0x74] sm:$0xf]
  %v56 = vld [vmem:[%s1 + $0x78] sm:$0xf]
  %v57 = vld [vmem:[%s1 + $0x7c] sm:$0xf]
  %v58 = vld [vmem:[%s1 + $0x80] sm:$0xf]
  %v59 = vld [vmem:[%s1 + $0x84] sm:$0xf]
  %v60 = vld [vmem:[%s1 + $0x88] sm:$0xf]
  %v61 = vld [vmem:[%s1 + $0x8c] sm:$0xf]
  %v62 = vld [vmem:[%s1 + $0x90] sm:$0xf]
  %v63 = vld [vmem:[%s1 + $0x94] sm:$0xf]
  %v64 = vld [vmem:[%s1 + $0x98] sm:$0xf]
  %v65 = vld [vmem:[%s1 + $0x9c] sm:$0xf]
  %v66 = vld [vmem:[%s1 + $0xa0] sm:$0xf]
  %v67 = vld [vmem:[%s1 + $0xa4] sm:$0xf]
  %v68 = vld [vmem:[%s1 + $0xa8] sm:$0xf]
  %v69 = vld [vmem:[%s1 + $0xac] sm:$0xf]
  %v70 = vld [vmem:[%s1 + $0xb0] sm:$0xf]
  %v71 = vld [vmem:[%s1 + $0xb4] sm:$0xf]
  %v72 = vld [vmem:[%s1 + $0xb8] sm:$0xf]
  %v73 = vld [vmem:[%s1 + $0xbc] sm:$0xf]
  %v78 = vunpack.c.l.b16 %v22
  %v79 = vunpack.c.h.b16 %v22
  %v80 = vunpack.c.l.b16 %v23
  %v81 = vunpack.c.l.b16 %v24
  %v82 = vunpack.c.h.b16 %v24
  %v83 = vunpack.c.l.b16 %v25
  %v84 = vpack.c.b16 %v81, %v78
  %v85 = vpack.c.b16 %v82, %v79
  %v86 = vpack.c.b16 %v83, %v80
  %v138 = vunpack.c.l.b16 %v26
  %v139 = vunpack.c.l.b16 %v27
  %v140 = vunpack.c.l.b16 %v28
  %v141 = vunpack.c.l.b16 %v29
  %v142 = vunpack.c.l.b16 %v30
  %v143 = vunpack.c.l.b16 %v31
  %v144 = vunpack.c.l.b16 %v32
  %v145 = vunpack.c.l.b16 %v33
  %v146 = vunpack.c.l.b16 %v34
  %v147 = vunpack.c.l.b16 %v35
  %v148 = vunpack.c.l.b16 %v36
  %v149 = vunpack.c.l.b16 %v37
  %v150 = vunpack.c.l.b16 %v38
  %v151 = vunpack.c.l.b16 %v39
  %v152 = vunpack.c.l.b16 %v40
  %v153 = vunpack.c.l.b16 %v41
  %v154 = vunpack.c.l.b16 %v42
  %v155 = vunpack.c.l.b16 %v43
  %v156 = vunpack.c.l.b16 %v44
  %v157 = vunpack.c.l.b16 %v45
  %v158 = vunpack.c.l.b16 %v46
  %v159 = vunpack.c.l.b16 %v47
  %v160 = vunpack.c.l.b16 %v48
  %v161 = vunpack.c.l.b16 %v49
  %v162 = vunpack.c.l.b16 %v50
  %v163 = vunpack.c.l.b16 %v51
  %v164 = vunpack.c.l.b16 %v52
  %v165 = vunpack.c.l.b16 %v53
  %v166 = vunpack.c.l.b16 %v54
  %v167 = vunpack.c.l.b16 %v55
  %v168 = vunpack.c.l.b16 %v56
  %v169 = vunpack.c.l.b16 %v57
  %v170 = vunpack.c.l.b16 %v58
  %v171 = vunpack.c.l.b16 %v59
  %v172 = vunpack.c.l.b16 %v60
  %v173 = vunpack.c.l.b16 %v61
  %v174 = vunpack.c.l.b16 %v62
  %v175 = vunpack.c.l.b16 %v63
  %v176 = vunpack.c.l.b16 %v64
  %v177 = vunpack.c.l.b16 %v65
  %v178 = vunpack.c.l.b16 %v66
  %v179 = vunpack.c.l.b16 %v67
  %v180 = vunpack.c.l.b16 %v68
  %v181 = vunpack.c.l.b16 %v69
  %v182 = vunpack.c.l.b16 %v70
  %v183 = vunpack.c.l.b16 %v71
  %v184 = vunpack.c.l.b16 %v72
  %v185 = vunpack.c.l.b16 %v73
  %v186 = vpack.c.b16 %v139, %v138
  %v187 = vpack.c.b16 %v141, %v140
  %v188 = vpack.c.b16 %v143, %v142
  %v189 = vpack.c.b16 %v145, %v144
  %v190 = vpack.c.b16 %v147, %v146
  %v191 = vpack.c.b16 %v149, %v148
  %v192 = vpack.c.b16 %v151, %v150
  %v193 = vpack.c.b16 %v153, %v152
  %v194 = vpack.c.b16 %v155, %v154
  %v195 = vpack.c.b16 %v157, %v156
  %v196 = vpack.c.b16 %v159, %v158
  %v197 = vpack.c.b16 %v161, %v160
  %v198 = vpack.c.b16 %v163, %v162
  %v199 = vpack.c.b16 %v165, %v164
  %v200 = vpack.c.b16 %v167, %v166
  %v201 = vpack.c.b16 %v169, %v168
  %v202 = vpack.c.b16 %v171, %v170
  %v203 = vpack.c.b16 %v173, %v172
  %v204 = vpack.c.b16 %v175, %v174
  %v205 = vpack.c.b16 %v177, %v176
  %v206 = vpack.c.b16 %v179, %v178
  %v207 = vpack.c.b16 %v181, %v180
  %v208 = vpack.c.b16 %v183, %v182
  %v209 = vpack.c.b16 %v185, %v184
  %234 = vmatpush.bf16.msra.mxu0 %v193
  %235 = vmatpush.bf16.msra.mxu0 %v192
  %236 = vmatpush.bf16.msra.mxu0 %v191
  %237 = vmatpush.bf16.msra.mxu0 %v190
  %238 = vmatpush.bf16.msra.mxu0 %v189
  %239 = vmatpush.bf16.msra.mxu0 %v188
  %240 = vmatpush.bf16.msra.mxu0 %v187
  %241 = vmatpush.bf16.msra.mxu0 %v186
  %242 = vmatmul.bf16.gmra.mxu0 %v84
  %v243 = vpop.f32.mrf.mxu0
  %v244 = vadd.f32 0.0, %v243
  %v245 = vpop.f32.mrf.mxu0
  %v246 = vadd.f32 0.0, %v245
  %247 = vdwg.mxu0
  %248 = vmatpush.bf16.msra.mxu0 %v201
  %249 = vmatpush.bf16.msra.mxu0 %v200
  %250 = vmatpush.bf16.msra.mxu0 %v199
  %251 = vmatpush.bf16.msra.mxu0 %v198
  %252 = vmatpush.bf16.msra.mxu0 %v197
  %253 = vmatpush.bf16.msra.mxu0 %v196
  %254 = vmatpush.bf16.msra.mxu0 %v195
  %255 = vmatpush.bf16.msra.mxu0 %v194
  %256 = vmatmul.bf16.gmra.mxu0 %v85
  %v257 = vpop.f32.mrf.mxu0
  %v258 = vadd.f32 %v244, %v257
  %v259 = vpop.f32.mrf.mxu0
  %v260 = vadd.f32 %v246, %v259
  %261 = vdwg.mxu0
  %262 = vmatpush.bf16.msra.mxu0 %v209
  %263 = vmatpush.bf16.msra.mxu0 %v208
  %264 = vmatpush.bf16.msra.mxu0 %v207
  %265 = vmatpush.bf16.msra.mxu0 %v206
  %266 = vmatpush.bf16.msra.mxu0 %v205
  %267 = vmatpush.bf16.msra.mxu0 %v204
  %268 = vmatpush.bf16.msra.mxu0 %v203
  %269 = vmatpush.bf16.msra.mxu0 %v202
  %270 = vmatmul.bf16.gmra.mxu0 %v86
  %v271 = vpop.f32.mrf.mxu0
  %v272 = vadd.f32 %v258, %v271
  %v273 = vpop.f32.mrf.mxu0
  %v274 = vadd.f32 %v260, %v273
  %275 = vdwg.mxu0
  %v276 = vadd.f32 %v20, %v272
  %v277 = vadd.f32 %v21, %v274
  %278 = vst [vmem:[#allocation2] sm:$0xff] %v276
  %279 = vst [vmem:[#allocation2 + $0x8] sm:$0xff] %v277
  // Predicated region
  $region18: #{_lambda_.18} parent=0 // pred_check
    %p280 = pneg %p14
  $region19: #{_lambda_.18} parent=0 // pred_check_branch
    %282 = sbr.rel (%p280) target = $region21
  $region20: #{_lambda_.18} parent=0 // pred_region
    %v283 = vld [vmem:[#allocation2] sm:$0xff]
    %v284 = vld [vmem:[#allocation2 + $0x8] sm:$0xff]
    %v285 = vld [vmem:[%s2] sm:$0x1]
    %v287 = vperm.slane %v285, 0
    %v289 = vadd.f32 %v283, %v287
    %v290 = vadd.f32 %v284, %v287
    %v291 = vmax.f32 %v289, 0.0
    %v292 = vmax.f32 %v290, 0.0
    %293 = vst [vmem:[%s3] sm:$0xff] %v291
    %294 = vst [vmem:[%s3 + $0x8] sm:$0xff] %v292
  $region21: #{_lambda_.18} parent=0 // pred_fallthru
    _
  // Predicated region
  $region22: #{_lambda_.18} parent=0 // pred_check
    _
  $region23: #{_lambda_.18} parent=0 // pred_check_branch
    %296 = sbr.rel (0) target = $region25
  $region24: #{_lambda_.18} parent=0 // pred_region
    _
  $region25: #{_lambda_.18} parent=0 // pred_fallthru
    _
  // Predicated region
  $region26: #{_lambda_.18} parent=0 // pred_check
    _
  $region27: #{_lambda_.18} parent=0 // pred_check_branch
    %298 = sbr.rel (0) target = $region29
  $region28: #{_lambda_.18} parent=0 // pred_region
    _
  $region29: #{_lambda_.18} parent=0 // pred_fallthru
    _

// kernel: _lambda_.17
$region0: #{_lambda_.17}
  #allocation0 [shape = 'u32[]', space=smem, size = 0x4, offset = 0x4, fixed_abs, tag = 'smem constant byte address 0x4 - core index']
  #allocation1 [shape = 'u32[72,128]{1,0:T(1,128)}', space=vmem, size = 0x9000, scoped, tag = 'internal scratch']
  #allocation2 [shape = 'f32[16,128]{1,0:T(8,128)}', space=vmem, size = 0x2000, scoped, tag = 'scratch operand']
  %s0 = inlined_call_operand.vmem [shape: bf16[16,128], index: 0, kind: input, shape index: {}]
  %s1 = inlined_call_operand.vmem [shape: bf16[128,128], index: 1, kind: input, shape index: {}]
  %s2 = inlined_call_operand.vmem [shape: f32[1,128], index: 2, kind: input, shape index: {}]
  %s3 = inlined_call_operand.vmem [shape: f32[16,128], index: 3, kind: output, shape index: {}]
  %s4 = sld [smem:[#allocation0]]
  $region30: #{_lambda_.17} parent=0
    _
  %s6 = ssub.s32 1, %s4
  %s7 = scalar_select 0, %s6, %s4
  // Predicated region
  $region2: #{_lambda_.17} parent=0 // pred_check
    _
  $region3: #{_lambda_.17} parent=0 // pred_check_branch
    %9 = sbr.rel (0) target = $region5
  $region4: #{_lambda_.17} parent=0 // pred_region
    _
  $region5: #{_lambda_.17} parent=0 // pred_fallthru
    _
  // Predicated region
  $region6: #{_lambda_.17} parent=0 // pred_check
    _
  $region7: #{_lambda_.17} parent=0 // pred_check_branch
    %11 = sbr.rel (0) target = $region9
  $region8: #{_lambda_.17} parent=0 // pred_region
    _
  $region9: #{_lambda_.17} parent=0 // pred_fallthru
    _
  // Predicated region
  $region10: #{_lambda_.17} parent=0 // pred_check
    _
  $region11: #{_lambda_.17} parent=0 // pred_check_branch
    %13 = sbr.rel (0) target = $region13
  $region12: #{_lambda_.17} parent=0 // pred_region
    _
  $region13: #{_lambda_.17} parent=0 // pred_fallthru
    _
  %p14 = scmp.eq.s32.totalorder 0, 0
  // Predicated region
  $region14: #{_lambda_.17} parent=0 // pred_check
    %p15 = pneg %p14
  $region15: #{_lambda_.17} parent=0 // pred_check_branch
    %17 = sbr.rel (%p15) target = $region17
  $region16: #{_lambda_.17} parent=0 // pred_region
    %18 = vst [vmem:[#allocation2] sm:$0xff] 0.0
    %19 = vst [vmem:[#allocation2 + $0x8] sm:$0xff] 0.0
  $region17: #{_lambda_.17} parent=0 // pred_fallthru
    _
  %v20 = vld [vmem:[#allocation2] sm:$0xff]
  %v21 = vld [vmem:[#allocation2 + $0x8] sm:$0xff]
  %v22 = vld [vmem:[%s0] sm:$0xf]
  %v23 = vld [vmem:[%s0 + $0x4] sm:$0xf]
  %v24 = vld [vmem:[%s1] sm:$0xf]
  %v25 = vld [vmem:[%s1 + $0x4] sm:$0xf]
  %v26 = vld [vmem:[%s1 + $0x8] sm:$0xf]
  %v27 = vld [vmem:[%s1 + $0xc] sm:$0xf]
  %v28 = vld [vmem:[%s1 + $0x10] sm:$0xf]
  %v29 = vld [vmem:[%s1 + $0x14] sm:$0xf]
  %v30 = vld [vmem:[%s1 + $0x18] sm:$0xf]
  %v31 = vld [vmem:[%s1 + $0x1c] sm:$0xf]
  %v32 = vld [vmem:[%s1 + $0x20] sm:$0xf]
  %v33 = vld [vmem:[%s1 + $0x24] sm:$0xf]
  %v34 = vld [vmem:[%s1 + $0x28] sm:$0xf]
  %v35 = vld [vmem:[%s1 + $0x2c] sm:$0xf]
  %v36 = vld [vmem:[%s1 + $0x30] sm:$0xf]
  %v37 = vld [vmem:[%s1 + $0x34] sm:$0xf]
  %v38 = vld [vmem:[%s1 + $0x38] sm:$0xf]
  %v39 = vld [vmem:[%s1 + $0x3c] sm:$0xf]
  %v42 = vunpack.c.l.b16 %v22
  %v43 = vunpack.c.l.b16 %v23
  %v44 = vpack.c.b16 %v43, %v42
  %v62 = vunpack.c.l.b16 %v24
  %v63 = vunpack.c.l.b16 %v25
  %v64 = vunpack.c.l.b16 %v26
  %v65 = vunpack.c.l.b16 %v27
  %v66 = vunpack.c.l.b16 %v28
  %v67 = vunpack.c.l.b16 %v29
  %v68 = vunpack.c.l.b16 %v30
  %v69 = vunpack.c.l.b16 %v31
  %v70 = vunpack.c.l.b16 %v32
  %v71 = vunpack.c.l.b16 %v33
  %v72 = vunpack.c.l.b16 %v34
  %v73 = vunpack.c.l.b16 %v35
  %v74 = vunpack.c.l.b16 %v36
  %v75 = vunpack.c.l.b16 %v37
  %v76 = vunpack.c.l.b16 %v38
  %v77 = vunpack.c.l.b16 %v39
  %v78 = vpack.c.b16 %v63, %v62
  %v79 = vpack.c.b16 %v65, %v64
  %v80 = vpack.c.b16 %v67, %v66
  %v81 = vpack.c.b16 %v69, %v68
  %v82 = vpack.c.b16 %v71, %v70
  %v83 = vpack.c.b16 %v73, %v72
  %v84 = vpack.c.b16 %v75, %v74
  %v85 = vpack.c.b16 %v77, %v76
  %94 = vmatpush.bf16.msra.mxu0 %v85
  %95 = vmatpush.bf16.msra.mxu0 %v84
  %96 = vmatpush.bf16.msra.mxu0 %v83
  %97 = vmatpush.bf16.msra.mxu0 %v82
  %98 = vmatpush.bf16.msra.mxu0 %v81
  %99 = vmatpush.bf16.msra.mxu0 %v80
  %100 = vmatpush.bf16.msra.mxu0 %v79
  %101 = vmatpush.bf16.msra.mxu0 %v78
  %102 = vmatmul.bf16.gmra.mxu0 %v44
  %v103 = vpop.f32.mrf.mxu0
  %v104 = vadd.f32 0.0, %v103
  %v105 = vpop.f32.mrf.mxu0
  %v106 = vadd.f32 0.0, %v105
  %107 = vdwg.mxu0
  %v108 = vadd.f32 %v20, %v104
  %v109 = vadd.f32 %v21, %v106
  %110 = vst [vmem:[#allocation2] sm:$0xff] %v108
  %111 = vst [vmem:[#allocation2 + $0x8] sm:$0xff] %v109
  // Predicated region
  $region18: #{_lambda_.17} parent=0 // pred_check
    %p112 = pneg %p14
  $region19: #{_lambda_.17} parent=0 // pred_check_branch
    %114 = sbr.rel (%p112) target = $region21
  $region20: #{_lambda_.17} parent=0 // pred_region
    %v115 = vld [vmem:[#allocation2] sm:$0xff]
    %v116 = vld [vmem:[#allocation2 + $0x8] sm:$0xff]
    %v117 = vld [vmem:[%s2] sm:$0x1]
    %v119 = vperm.slane %v117, 0
    %v121 = vadd.f32 %v115, %v119
    %v122 = vadd.f32 %v116, %v119
    %123 = vst [vmem:[%s3] sm:$0xff] %v121
    %124 = vst [vmem:[%s3 + $0x8] sm:$0xff] %v122
  $region21: #{_lambda_.17} parent=0 // pred_fallthru
    _
  // Predicated region
  $region22: #{_lambda_.17} parent=0 // pred_check
    _
  $region23: #{_lambda_.17} parent=0 // pred_check_branch
    %126 = sbr.rel (0) target = $region25
  $region24: #{_lambda_.17} parent=0 // pred_region
    _
  $region25: #{_lambda_.17} parent=0 // pred_fallthru
    _
  // Predicated region
  $region26: #{_lambda_.17} parent=0 // pred_check
    _
  $region27: #{_lambda_.17} parent=0 // pred_check_branch
    %128 = sbr.rel (0) target = $region29
  $region28: #{_lambda_.17} parent=0 // pred_region
    _
  $region29: #{_lambda_.17} parent=0 // pred_fallthru
    _

// kernel: _lambda_.19
$region0: #{_lambda_.19}
  #allocation0 [shape = 'u32[]', space=smem, size = 0x4, offset = 0x4, fixed_abs, tag = 'smem constant byte address 0x4 - core index']
  #allocation1 [shape = 'u32[72,128]{1,0:T(1,128)}', space=vmem, size = 0x9000, scoped, tag = 'internal scratch']
  #allocation2 [shape = 'f32[16,128]{1,0:T(8,128)}', space=vmem, size = 0x2000, scoped, tag = 'scratch operand']
  %s0 = inlined_call_operand.vmem [shape: bf16[16,384], index: 0, kind: input, shape index: {}]
  %s1 = inlined_call_operand.vmem [shape: bf16[384,128], index: 1, kind: input, shape index: {}]
  %s2 = inlined_call_operand.vmem [shape: f32[1,128], index: 2, kind: input, shape index: {}]
  %s3 = inlined_call_operand.vmem [shape: f32[16,128], index: 3, kind: input, shape index: {}]
  %s4 = inlined_call_operand.vmem [shape: f32[16,128], index: 4, kind: output, shape index: {}]
  %s5 = sld [smem:[#allocation0]]
  $region34: #{_lambda_.19} parent=0
    _
  %s7 = ssub.s32 1, %s5
  %s8 = scalar_select 0, %s7, %s5
  // Predicated region
  $region2: #{_lambda_.19} parent=0 // pred_check
    _
  $region3: #{_lambda_.19} parent=0 // pred_check_branch
    %10 = sbr.rel (0) target = $region5
  $region4: #{_lambda_.19} parent=0 // pred_region
    _
  $region5: #{_lambda_.19} parent=0 // pred_fallthru
    _
  // Predicated region
  $region6: #{_lambda_.19} parent=0 // pred_check
    _
  $region7: #{_lambda_.19} parent=0 // pred_check_branch
    %12 = sbr.rel (0) target = $region9
  $region8: #{_lambda_.19} parent=0 // pred_region
    _
  $region9: #{_lambda_.19} parent=0 // pred_fallthru
    _
  // Predicated region
  $region10: #{_lambda_.19} parent=0 // pred_check
    _
  $region11: #{_lambda_.19} parent=0 // pred_check_branch
    %14 = sbr.rel (0) target = $region13
  $region12: #{_lambda_.19} parent=0 // pred_region
    _
  $region13: #{_lambda_.19} parent=0 // pred_fallthru
    _
  // Predicated region
  $region14: #{_lambda_.19} parent=0 // pred_check
    _
  $region15: #{_lambda_.19} parent=0 // pred_check_branch
    %16 = sbr.rel (0) target = $region17
  $region16: #{_lambda_.19} parent=0 // pred_region
    _
  $region17: #{_lambda_.19} parent=0 // pred_fallthru
    _
  %p17 = scmp.eq.s32.totalorder 0, 0
  // Predicated region
  $region18: #{_lambda_.19} parent=0 // pred_check
    %p18 = pneg %p17
  $region19: #{_lambda_.19} parent=0 // pred_check_branch
    %20 = sbr.rel (%p18) target = $region21
  $region20: #{_lambda_.19} parent=0 // pred_region
    %21 = vst [vmem:[#allocation2] sm:$0xff] 0.0
    %22 = vst [vmem:[#allocation2 + $0x8] sm:$0xff] 0.0
  $region21: #{_lambda_.19} parent=0 // pred_fallthru
    _
  %v23 = vld [vmem:[#allocation2] sm:$0xff]
  %v24 = vld [vmem:[#allocation2 + $0x8] sm:$0xff]
  %v25 = vld [vmem:[%s0] sm:$0xff]
  %v26 = vld [vmem:[%s0 + $0x8] sm:$0xf]
  %v27 = vld [vmem:[%s0 + $0xc] sm:$0xff]
  %v28 = vld [vmem:[%s0 + $0x14] sm:$0xf]
  %v29 = vld [vmem:[%s1] sm:$0xf]
  %v30 = vld [vmem:[%s1 + $0x4] sm:$0xf]
  %v31 = vld [vmem:[%s1 + $0x8] sm:$0xf]
  %v32 = vld [vmem:[%s1 + $0xc] sm:$0xf]
  %v33 = vld [vmem:[%s1 + $0x10] sm:$0xf]
  %v34 = vld [vmem:[%s1 + $0x14] sm:$0xf]
  %v35 = vld [vmem:[%s1 + $0x18] sm:$0xf]
  %v36 = vld [vmem:[%s1 + $0x1c] sm:$0xf]
  %v37 = vld [vmem:[%s1 + $0x20] sm:$0xf]
  %v38 = vld [vmem:[%s1 + $0x24] sm:$0xf]
  %v39 = vld [vmem:[%s1 + $0x28] sm:$0xf]
  %v40 = vld [vmem:[%s1 + $0x2c] sm:$0xf]
  %v41 = vld [vmem:[%s1 + $0x30] sm:$0xf]
  %v42 = vld [vmem:[%s1 + $0x34] sm:$0xf]
  %v43 = vld [vmem:[%s1 + $0x38] sm:$0xf]
  %v44 = vld [vmem:[%s1 + $0x3c] sm:$0xf]
  %v45 = vld [vmem:[%s1 + $0x40] sm:$0xf]
  %v46 = vld [vmem:[%s1 + $0x44] sm:$0xf]
  %v47 = vld [vmem:[%s1 + $0x48] sm:$0xf]
  %v48 = vld [vmem:[%s1 + $0x4c] sm:$0xf]
  %v49 = vld [vmem:[%s1 + $0x50] sm:$0xf]
  %v50 = vld [vmem:[%s1 + $0x54] sm:$0xf]
  %v51 = vld [vmem:[%s1 + $0x58] sm:$0xf]
  %v52 = vld [vmem:[%s1 + $0x5c] sm:$0xf]
  %v53 = vld [vmem:[%s1 + $0x60] sm:$0xf]
  %v54 = vld [vmem:[%s1 + $0x64] sm:$0xf]
  %v55 = vld [vmem:[%s1 + $0x68] sm:$0xf]
  %v56 = vld [vmem:[%s1 + $0x6c] sm:$0xf]
  %v57 = vld [vmem:[%s1 + $0x70] sm:$0xf]
  %v58 = vld [vmem:[%s1 + $0x74] sm:$0xf]
  %v59 = vld [vmem:[%s1 + $0x78] sm:$0xf]
  %v60 = vld [vmem:[%s1 + $0x7c] sm:$0xf]
  %v61 = vld [vmem:[%s1 + $0x80] sm:$0xf]
  %v62 = vld [vmem:[%s1 + $0x84] sm:$0xf]
  %v63 = vld [vmem:[%s1 + $0x88] sm:$0xf]
  %v64 = vld [vmem:[%s1 + $0x8c] sm:$0xf]
  %v65 = vld [vmem:[%s1 + $0x90] sm:$0xf]
  %v66 = vld [vmem:[%s1 + $0x94] sm:$0xf]
  %v67 = vld [vmem:[%s1 + $0x98] sm:$0xf]
  %v68 = vld [vmem:[%s1 + $0x9c] sm:$0xf]
  %v69 = vld [vmem:[%s1 + $0xa0] sm:$0xf]
  %v70 = vld [vmem:[%s1 + $0xa4] sm:$0xf]
  %v71 = vld [vmem:[%s1 + $0xa8] sm:$0xf]
  %v72 = vld [vmem:[%s1 + $0xac] sm:$0xf]
  %v73 = vld [vmem:[%s1 + $0xb0] sm:$0xf]
  %v74 = vld [vmem:[%s1 + $0xb4] sm:$0xf]
  %v75 = vld [vmem:[%s1 + $0xb8] sm:$0xf]
  %v76 = vld [vmem:[%s1 + $0xbc] sm:$0xf]
  %v81 = vunpack.c.l.b16 %v25
  %v82 = vunpack.c.h.b16 %v25
  %v83 = vunpack.c.l.b16 %v26
  %v84 = vunpack.c.l.b16 %v27
  %v85 = vunpack.c.h.b16 %v27
  %v86 = vunpack.c.l.b16 %v28
  %v87 = vpack.c.b16 %v84, %v81
  %v88 = vpack.c.b16 %v85, %v82
  %v89 = vpack.c.b16 %v86, %v83
  %v141 = vunpack.c.l.b16 %v29
  %v142 = vunpack.c.l.b16 %v30
  %v143 = vunpack.c.l.b16 %v31
  %v144 = vunpack.c.l.b16 %v32
  %v145 = vunpack.c.l.b16 %v33
  %v146 = vunpack.c.l.b16 %v34
  %v147 = vunpack.c.l.b16 %v35
  %v148 = vunpack.c.l.b16 %v36
  %v149 = vunpack.c.l.b16 %v37
  %v150 = vunpack.c.l.b16 %v38
  %v151 = vunpack.c.l.b16 %v39
  %v152 = vunpack.c.l.b16 %v40
  %v153 = vunpack.c.l.b16 %v41
  %v154 = vunpack.c.l.b16 %v42
  %v155 = vunpack.c.l.b16 %v43
  %v156 = vunpack.c.l.b16 %v44
  %v157 = vunpack.c.l.b16 %v45
  %v158 = vunpack.c.l.b16 %v46
  %v159 = vunpack.c.l.b16 %v47
  %v160 = vunpack.c.l.b16 %v48
  %v161 = vunpack.c.l.b16 %v49
  %v162 = vunpack.c.l.b16 %v50
  %v163 = vunpack.c.l.b16 %v51
  %v164 = vunpack.c.l.b16 %v52
  %v165 = vunpack.c.l.b16 %v53
  %v166 = vunpack.c.l.b16 %v54
  %v167 = vunpack.c.l.b16 %v55
  %v168 = vunpack.c.l.b16 %v56
  %v169 = vunpack.c.l.b16 %v57
  %v170 = vunpack.c.l.b16 %v58
  %v171 = vunpack.c.l.b16 %v59
  %v172 = vunpack.c.l.b16 %v60
  %v173 = vunpack.c.l.b16 %v61
  %v174 = vunpack.c.l.b16 %v62
  %v175 = vunpack.c.l.b16 %v63
  %v176 = vunpack.c.l.b16 %v64
  %v177 = vunpack.c.l.b16 %v65
  %v178 = vunpack.c.l.b16 %v66
  %v179 = vunpack.c.l.b16 %v67
  %v180 = vunpack.c.l.b16 %v68
  %v181 = vunpack.c.l.b16 %v69
  %v182 = vunpack.c.l.b16 %v70
  %v183 = vunpack.c.l.b16 %v71
  %v184 = vunpack.c.l.b16 %v72
  %v185 = vunpack.c.l.b16 %v73
  %v186 = vunpack.c.l.b16 %v74
  %v187 = vunpack.c.l.b16 %v75
  %v188 = vunpack.c.l.b16 %v76
  %v189 = vpack.c.b16 %v142, %v141
  %v190 = vpack.c.b16 %v144, %v143
  %v191 = vpack.c.b16 %v146, %v145
  %v192 = vpack.c.b16 %v148, %v147
  %v193 = vpack.c.b16 %v150, %v149
  %v194 = vpack.c.b16 %v152, %v151
  %v195 = vpack.c.b16 %v154, %v153
  %v196 = vpack.c.b16 %v156, %v155
  %v197 = vpack.c.b16 %v158, %v157
  %v198 = vpack.c.b16 %v160, %v159
  %v199 = vpack.c.b16 %v162, %v161
  %v200 = vpack.c.b16 %v164, %v163
  %v201 = vpack.c.b16 %v166, %v165
  %v202 = vpack.c.b16 %v168, %v167
  %v203 = vpack.c.b16 %v170, %v169
  %v204 = vpack.c.b16 %v172, %v171
  %v205 = vpack.c.b16 %v174, %v173
  %v206 = vpack.c.b16 %v176, %v175
  %v207 = vpack.c.b16 %v178, %v177
  %v208 = vpack.c.b16 %v180, %v179
  %v209 = vpack.c.b16 %v182, %v181
  %v210 = vpack.c.b16 %v184, %v183
  %v211 = vpack.c.b16 %v186, %v185
  %v212 = vpack.c.b16 %v188, %v187
  %237 = vmatpush.bf16.msra.mxu0 %v196
  %238 = vmatpush.bf16.msra.mxu0 %v195
  %239 = vmatpush.bf16.msra.mxu0 %v194
  %240 = vmatpush.bf16.msra.mxu0 %v193
  %241 = vmatpush.bf16.msra.mxu0 %v192
  %242 = vmatpush.bf16.msra.mxu0 %v191
  %243 = vmatpush.bf16.msra.mxu0 %v190
  %244 = vmatpush.bf16.msra.mxu0 %v189
  %245 = vmatmul.bf16.gmra.mxu0 %v87
  %v246 = vpop.f32.mrf.mxu0
  %v247 = vadd.f32 0.0, %v246
  %v248 = vpop.f32.mrf.mxu0
  %v249 = vadd.f32 0.0, %v248
  %250 = vdwg.mxu0
  %251 = vmatpush.bf16.msra.mxu0 %v204
  %252 = vmatpush.bf16.msra.mxu0 %v203
  %253 = vmatpush.bf16.msra.mxu0 %v202
  %254 = vmatpush.bf16.msra.mxu0 %v201
  %255 = vmatpush.bf16.msra.mxu0 %v200
  %256 = vmatpush.bf16.msra.mxu0 %v199
  %257 = vmatpush.bf16.msra.mxu0 %v198
  %258 = vmatpush.bf16.msra.mxu0 %v197
  %259 = vmatmul.bf16.gmra.mxu0 %v88
  %v260 = vpop.f32.mrf.mxu0
  %v261 = vadd.f32 %v247, %v260
  %v262 = vpop.f32.mrf.mxu0
  %v263 = vadd.f32 %v249, %v262
  %264 = vdwg.mxu0
  %265 = vmatpush.bf16.msra.mxu0 %v212
  %266 = vmatpush.bf16.msra.mxu0 %v211
  %267 = vmatpush.bf16.msra.mxu0 %v210
  %268 = vmatpush.bf16.msra.mxu0 %v209
  %269 = vmatpush.bf16.msra.mxu0 %v208
  %270 = vmatpush.bf16.msra.mxu0 %v207
  %271 = vmatpush.bf16.msra.mxu0 %v206
  %272 = vmatpush.bf16.msra.mxu0 %v205
  %273 = vmatmul.bf16.gmra.mxu0 %v89
  %v274 = vpop.f32.mrf.mxu0
  %v275 = vadd.f32 %v261, %v274
  %v276 = vpop.f32.mrf.mxu0
  %v277 = vadd.f32 %v263, %v276
  %278 = vdwg.mxu0
  %v279 = vadd.f32 %v23, %v275
  %v280 = vadd.f32 %v24, %v277
  %281 = vst [vmem:[#allocation2] sm:$0xff] %v279
  %282 = vst [vmem:[#allocation2 + $0x8] sm:$0xff] %v280
  // Predicated region
  $region22: #{_lambda_.19} parent=0 // pred_check
    %p283 = pneg %p17
  $region23: #{_lambda_.19} parent=0 // pred_check_branch
    %285 = sbr.rel (%p283) target = $region25
  $region24: #{_lambda_.19} parent=0 // pred_region
    %v286 = vld [vmem:[#allocation2] sm:$0xff]
    %v287 = vld [vmem:[#allocation2 + $0x8] sm:$0xff]
    %v288 = vld [vmem:[%s2] sm:$0x1]
    %v290 = vperm.slane %v288, 0
    %v292 = vadd.f32 %v286, %v290
    %v293 = vadd.f32 %v287, %v290
    %v294 = vld [vmem:[%s3] sm:$0xff]
    %v295 = vld [vmem:[%s3 + $0x8] sm:$0xff]
    %v296 = vadd.f32 %v292, %v294
    %v297 = vadd.f32 %v293, %v295
    %v298 = vmax.f32 %v296, 0.0
    %v299 = vmax.f32 %v297, 0.0
    %300 = vst [vmem:[%s4] sm:$0xff] %v298
    %301 = vst [vmem:[%s4 + $0x8] sm:$0xff] %v299
  $region25: #{_lambda_.19} parent=0 // pred_fallthru
    _
  // Predicated region
  $region26: #{_lambda_.19} parent=0 // pred_check
    _
  $region27: #{_lambda_.19} parent=0 // pred_check_branch
    %303 = sbr.rel (0) target = $region29
  $region28: #{_lambda_.19} parent=0 // pred_region
    _
  $region29: #{_lambda_.19} parent=0 // pred_fallthru
    _
  // Predicated region
  $region30: #{_lambda_.19} parent=0 // pred_check
    _
  $region31: #{_lambda_.19} parent=0 // pred_check_branch
    %305 = sbr.rel (0) target = $region33
  $region32: #{_lambda_.19} parent=0 // pred_region
    _
  $region33: #{_lambda_.19} parent=0 // pred_fallthru
    _

</llo_original>
